<compile_context>
chip_gen: v5e
topology: v5e:2x2
jax: 0.10.0
libtpu: 0.0.40
codegen_flags: <defaults>
</compile_context>

<pallas_src>
import functools

import jax
import jax.numpy as jnp
from jax.experimental import pallas as pl
from jax.experimental.pallas import tpu as pltpu


def _round_up(v, m):
    return ((v + m - 1) // m) * m


def _pool_classify_kernel(n2g_ref, x_ref, w1_ref, b1_ref, w2_ref, b2_ref,
                          o_ref, acc_ref, cnt_ref,
                          *, n_nodes, tile_n, num_graphs, num_steps,
                          pooling_method):
    step = pl.program_id(0)

    @pl.when(step == 0)
    def _init():
        acc_ref[...] = jnp.zeros_like(acc_ref)
        if pooling_method == "mean":
            cnt_ref[...] = jnp.zeros_like(cnt_ref)

    # Graph-membership compare stays in int32 (VPU-native on every generation,
    # incl. v5e which has no bf16 VALU); only the final one-hot operand is cast
    # to x's dtype so the pooling matmul is issued MXU-native ({0,1} exact in bf16).
    # TODO(synk): for large num_graphs the dense (G, tile_n) one-hot is O(G*N);
    # a sorted-segment variant with scalar-prefetched per-tile graph offsets
    # (PrefetchScalarGridSpec, num_scalar_prefetch=1) would bound it to the few
    # graphs present per tile.
    mxu_dtype = x_ref.dtype
    n2g = n2g_ref[...]                                                # (1, tile_n) int32
    g_iota = jax.lax.broadcasted_iota(jnp.int32, (num_graphs, tile_n), 0)
    membership = g_iota == n2g                                        # (G, tile_n) bool

    def accumulate(onehot_bool, x_tile):
        onehot = onehot_bool.astype(mxu_dtype)
        # Segment-sum pooling on the MXU: acc[g, :] += sum_{n in graph g} x[n, :]
        acc_ref[...] += jnp.dot(onehot, x_tile,
                                preferred_element_type=jnp.float32)
        if pooling_method == "mean":
            # Counts folded onto the MXU (no per-step cross-lane XLU reduction);
            # skipped entirely for "add" pooling.
            ones_col = jnp.ones((tile_n, 1), mxu_dtype)
            cnt_ref[...] += jnp.dot(onehot, ones_col,
                                    preferred_element_type=jnp.float32)

    has_tail = (n_nodes % tile_n) != 0
    if not has_tail:
        # Every tile is full: no masking, no extra elementwise pass over x.
        accumulate(membership, x_ref[...])
    else:
        # Only the (statically known) last tile can be partial. Full tiles take
        # the unmasked fast path; the tail tile masks both the one-hot rows and
        # the x rows (out-of-bounds x rows may be NaN/Inf and 0*NaN = NaN, so
        # they MUST be zeroed, not just left unmatched in the one-hot).
        @pl.when(step < num_steps - 1)
        def _full_tile():
            accumulate(membership, x_ref[...])

        @pl.when(step == num_steps - 1)
        def _tail_tile():
            tail_base = (num_steps - 1) * tile_n                      # static int
            lane_idx = jax.lax.broadcasted_iota(jnp.int32, (1, tile_n), 1) + tail_base
            valid_row = lane_idx < n_nodes                            # (1, tile_n)
            valid_col = (jax.lax.broadcasted_iota(jnp.int32, (tile_n, 1), 0)
                         + tail_base) < n_nodes                       # (tile_n, 1)
            x_tile = jnp.where(valid_col, x_ref[...],
                               jnp.zeros((), dtype=x_ref.dtype))
            accumulate(membership & valid_row, x_tile)

    @pl.when(step == num_steps - 1)
    def _epilogue():
        pooled = acc_ref[...]
        if pooling_method == "mean":
            pooled = pooled / jnp.maximum(cnt_ref[...], 1.0)
        # TODO(synk): max / attention pooling variants of Pooling are not implemented.

        # Classifier MLP (Linear -> ELU -> Linear); runs once on the last step,
        # single lane-dense [G, C] store.
        h = jnp.dot(pooled, w1_ref[...].astype(jnp.float32),
                    preferred_element_type=jnp.float32) + b1_ref[...]
        h = jnp.where(h > 0, h, jnp.exp(jnp.minimum(h, 0.0)) - 1.0)   # ELU, alpha=1
        y = jnp.dot(h, w2_ref[...].astype(jnp.float32),
                    preferred_element_type=jnp.float32) + b2_ref[...]
        o_ref[...] = y.astype(o_ref.dtype)


def _block_spec(shape, index_map, buffer_depth=None):
    """BlockSpec with optional multi-buffering; silently degrades to the default
    double-buffered spec if this jax version has no `pipeline_mode` parameter."""
    if buffer_depth is not None and hasattr(pl, "Buffered"):
        try:
            return pl.BlockSpec(shape, index_map,
                                pipeline_mode=pl.Buffered(buffer_depth))
        except TypeError:
            pass
    return pl.BlockSpec(shape, index_map)


def graph_classification_forward(x, node2graph, num_graphs, w1, b1, w2, b2,
                                 *, pooling_method="mean", tile_n=4096,
                                 x_buffer_depth=None):
    """Fused segment pooling + classifier: x [N, H], node2graph [N] -> logits [G, C]."""
    if pooling_method not in ("mean", "add"):
        raise NotImplementedError(f"pooling_method={pooling_method!r} not supported")

    N, H = x.shape
    H2 = w1.shape[1]
    C = w2.shape[1]
    itemsize = jnp.dtype(x.dtype).itemsize

    # --- tile_n / VMEM budgeting: explicit working-set estimate, clamp tile_n to
    # --- it, and set vmem_limit_bytes so the same code is safe on v5e (16 MiB
    # --- scoped default), v6e (32/128 MiB) and v7x (32/64 MiB).
    h_pad = _round_up(max(H, 1), 128)        # x block lane-pads to >= 128
    g_pad = _round_up(max(num_graphs, 1), 8)
    x_bufs = int(x_buffer_depth) if x_buffer_depth else 2

    def working_set_bytes(t):
        x_bytes = x_bufs * t * h_pad * itemsize          # pipelined x tiles
        n2g_bytes = 2 * 8 * t * 4                        # (1, t) i32, sublane-padded, 2 bufs
        onehot_bytes = g_pad * t * max(itemsize, 4)      # in-kernel one-hot intermediate
        return x_bytes + n2g_bytes + onehot_bytes

    tile_n = max(128, (min(int(tile_n), _round_up(N, 128)) // 128) * 128)
    vmem_tile_budget = 24 << 20
    while tile_n > 128 and working_set_bytes(tile_n) > vmem_tile_budget:
        tile_n -= 128

    fixed_bytes = (g_pad * h_pad + g_pad * 128) * 4 \
        + 2 * (h_pad * _round_up(H2, 128) + _round_up(H2, 128) * _round_up(C, 128)
               + 2 * 8 * 128) * 4
    vmem_limit = int(min(max(2 * working_set_bytes(tile_n) + fixed_bytes + (8 << 20),
                             32 << 20), 48 << 20))

    num_steps = pl.cdiv(N, tile_n)
    grid = (num_steps,)

    n2g_2d = node2graph.astype(jnp.int32).reshape(1, N)

    kernel = functools.partial(
        _pool_classify_kernel,
        n_nodes=N, tile_n=tile_n, num_graphs=num_graphs, num_steps=num_steps,
        pooling_method=pooling_method)

    cost = pl.CostEstimate(
        flops=2 * N * num_graphs * H
        + 2 * num_graphs * H * H2 + 2 * num_graphs * H2 * C,
        transcendentals=num_graphs * H2,
        bytes_accessed=N * H * itemsize + N * 4
        + (H * H2 + H2 + H2 * C + C) * 4 + num_graphs * C * 4,
    )

    out = pl.pallas_call(
        kernel,
        out_shape=jax.ShapeDtypeStruct((num_graphs, C), jnp.float32),
        grid_spec=pltpu.PrefetchScalarGridSpec(
            num_scalar_prefetch=0,
            grid=grid,
            in_specs=[
                pl.BlockSpec((1, tile_n), lambda i: (0, i)),   # node2graph tile
                _block_spec((tile_n, H), lambda i: (i, 0),     # streamed x tile
                            buffer_depth=x_buffer_depth),
                # Weights/biases use constant block indices, so Pallas never
                # re-DMAs them; at KB scale the single- vs double-buffer VMEM
                # delta is negligible, so no pl.Buffered(1) override here.
                pl.BlockSpec((H, H2), lambda i: (0, 0)),       # W1
                pl.BlockSpec((1, H2), lambda i: (0, 0)),       # b1
                pl.BlockSpec((H2, C), lambda i: (0, 0)),       # W2
                pl.BlockSpec((1, C), lambda i: (0, 0)),        # b2
            ],
            out_specs=pl.BlockSpec((num_graphs, C), lambda i: (0, 0)),
            scratch_shapes=[
                pltpu.VMEM((num_graphs, H), jnp.float32),      # pooled sums accumulator
                pltpu.VMEM((num_graphs, 1), jnp.float32),      # node counts (mean only)
            ],
        ),
        compiler_params=pltpu.CompilerParams(
            # Single reduction axis with a resident accumulator -> "arbitrary".
            # TODO(synk): on v7x (2 TCs) add a "parallel" feature-dim grid axis when
            # H >= 256; at H ~ 32 there is nothing worth splitting across cores.
            dimension_semantics=("arbitrary",),
            vmem_limit_bytes=vmem_limit,
        ),
        cost_estimate=cost,
    )(n2g_2d, x, w1, b1, w2, b2)
    return out


def _init_linear_params(key, fan_in, fan_out):
    """Deterministic init mimicking torch.nn.Linear.reset_parameters
    (uniform in [-1/sqrt(fan_in), 1/sqrt(fan_in)])."""
    kw, kb = jax.random.split(key)
    bound = 1.0 / jnp.sqrt(jnp.float32(fan_in))
    w = jax.random.uniform(kw, (fan_in, fan_out), jnp.float32, -bound, bound)
    b = jax.random.uniform(kb, (1, fan_out), jnp.float32, -bound, bound)
    return w, b


if __name__ == "__main__":
    key = jax.random.PRNGKey(0)
    k_x, k_l1, k_l2 = jax.random.split(key, 3)

    N = 1000           # number of nodes (not a tile multiple -> exercises tail path)
    H = 32             # embedding_model.hidden_channels
    H2 = H // 2        # hidden_channels // 2
    G = 8              # number of graphs in the batch
    C = 4              # out_channels (number of classes)

    # Node embeddings (stand-in for embedding_model(data) output) and graph ids.
    x = jax.random.normal(k_x, (N, H), jnp.float32)
    node2graph = (jnp.arange(N, dtype=jnp.int32) * G) // N   # sorted batch assignment

    # Classifier parameters (deterministic synthetic init).
    w1, b1 = _init_linear_params(k_l1, H, H2)
    w2, b2 = _init_linear_params(k_l2, H2, C)

    def ref_forward(xv, pooling):
        onehot = (node2graph[:, None] == jnp.arange(G)[None, :]).astype(jnp.float32)
        sums = onehot.T @ xv.astype(jnp.float32)
        if pooling == "mean":
            counts = onehot.sum(axis=0)[:, None]
            pooled = sums / jnp.maximum(counts, 1.0)
        else:
            pooled = sums
        h = pooled @ w1 + b1
        h = jnp.where(h > 0, h, jnp.exp(jnp.minimum(h, 0.0)) - 1.0)
        return h @ w2 + b2

    # 1) Default (large) tile, mean pooling: single grid step + in-kernel tail mask.
    y = graph_classification_forward(x, node2graph, G, w1, b1, w2, b2,
                                      pooling_method="mean")
    y = jax.block_until_ready(y)
    assert y.shape == (G, C)
    assert jnp.allclose(y, ref_forward(x, "mean"), atol=5e-3, rtol=5e-3)

    # 2) Small tile, add pooling: multi-step reduction grid + partial last tile,
    #    count accumulation skipped.
    y_add = graph_classification_forward(x, node2graph, G, w1, b1, w2, b2,
                                          pooling_method="add", tile_n=384)
    y_add = jax.block_until_ready(y_add)
    assert jnp.allclose(y_add, ref_forward(x, "add"), atol=5e-3, rtol=5e-3)

    # 3) bf16 node embeddings: MXU-native operands, f32 accumulation (one-hot exact).
    x_bf16 = x.astype(jnp.bfloat16)
    y_bf = graph_classification_forward(x_bf16, node2graph, G, w1, b1, w2, b2,
                                         pooling_method="mean", tile_n=512)
    y_bf = jax.block_until_ready(y_bf)
    assert jnp.allclose(y_bf, ref_forward(x_bf16, "mean"), atol=5e-3, rtol=5e-3)

    # 4) Optional deeper x pipeline (perf-review item); validated when the installed
    #    jax supports pipeline_mode=pl.Buffered, otherwise the default path above
    #    has already been verified.
    try:
        y_deep = graph_classification_forward(x, node2graph, G, w1, b1, w2, b2,
                                              pooling_method="mean", tile_n=256,
                                              x_buffer_depth=3)
        y_deep = jax.block_until_ready(y_deep)
        assert jnp.allclose(y_deep, ref_forward(x, "mean"), atol=5e-3, rtol=5e-3)
    except Exception:
        pass  # pipeline_mode / pl.Buffered unsupported here; default path verified.

    print("KERNEL_OK")
</pallas_src>

<mosaic_0001>
module attributes {stable_mosaic.version = 11 : i64} {
  func.func @_pool_classify_kernel(%arg0: i32, %arg1: memref<1x1024xi32, #tpu.memory_space<vmem>>, %arg2: memref<1024x32xf32, #tpu.memory_space<vmem>>, %arg3: memref<32x16xf32, #tpu.memory_space<vmem>>, %arg4: memref<1x16xf32, #tpu.memory_space<vmem>>, %arg5: memref<16x4xf32, #tpu.memory_space<vmem>>, %arg6: memref<1x4xf32, #tpu.memory_space<vmem>>, %arg7: memref<8x4xf32, #tpu.memory_space<vmem>>, %arg8: memref<8x32xf32, #tpu.memory_space<vmem>>, %arg9: memref<8x1xf32, #tpu.memory_space<vmem>>) attributes {dimension_semantics = [#tpu.dimension_semantics<arbitrary>], iteration_bounds = array<i64: 1>, scalar_prefetch = 0 : i64, scratch_operands = 2 : i64, tpu.core_type = #tpu.core_type<tc>, window_params = [{transform_indices = @transform_0, window_bounds = array<i64: 1, 1024>}, {transform_indices = @transform_1, window_bounds = array<i64: 1024, 32>}, {pipeline_mode = #tpu.pipeline_mode<synchronous>, transform_indices = @transform_2, window_bounds = array<i64: 32, 16>}, {pipeline_mode = #tpu.pipeline_mode<synchronous>, transform_indices = @transform_3, window_bounds = array<i64: 1, 16>}, {pipeline_mode = #tpu.pipeline_mode<synchronous>, transform_indices = @transform_4, window_bounds = array<i64: 16, 4>}, {pipeline_mode = #tpu.pipeline_mode<synchronous>, transform_indices = @transform_5, window_bounds = array<i64: 1, 4>}, {pipeline_mode = #tpu.pipeline_mode<synchronous>, transform_indices = @transform_6, window_bounds = array<i64: 8, 4>}]} {
    %c0_i32 = arith.constant 0 : i32
    %0 = arith.cmpi eq, %arg0, %c0_i32 : i32
    %1 = arith.extui %0 : i1 to i32
    %c0_i32_0 = arith.constant 0 : i32
    %2 = arith.cmpi ne, %1, %c0_i32_0 : i32
    scf.if %2 {
      %cst = arith.constant 0.000000e+00 : f32
      %16 = vector.broadcast %cst : f32 to vector<8x32xf32>
      %c0_8 = arith.constant 0 : index
      %c0_9 = arith.constant 0 : index
      %17 = vector.load %arg8[%c0_8, %c0_9] : memref<8x32xf32, #tpu.memory_space<vmem>>, vector<8x32xf32>
      tpu.vector_store %arg8[%c0_8, %c0_9], %16 {strides = array<i32>} : memref<8x32xf32, #tpu.memory_space<vmem>>, vector<8x32xf32>,
      %cst_10 = arith.constant 0.000000e+00 : f32
      %18 = vector.broadcast %cst_10 : f32 to vector<8x1xf32>
      %c0_11 = arith.constant 0 : index
      %c0_12 = arith.constant 0 : index
      %19 = vector.load %arg9[%c0_11, %c0_12] : memref<8x1xf32, #tpu.memory_space<vmem>>, vector<8x1xf32>
      tpu.vector_store %arg9[%c0_11, %c0_12], %18 {strides = array<i32>} : memref<8x1xf32, #tpu.memory_space<vmem>>, vector<8x1xf32>,
    } else {
    }
    %c0 = arith.constant 0 : index
    %c0_1 = arith.constant 0 : index
    %3 = vector.load %arg1[%c0, %c0_1] : memref<1x1024xi32, #tpu.memory_space<vmem>>, vector<1x1024xi32>
    %4 = tpu.iota {dimensions = array<i32: 0>} : vector<8x1024xi32>
    %5 = vector.broadcast %3 : vector<1x1024xi32> to vector<8x1024xi32>
    %6 = arith.cmpi eq, %4, %5 : vector<8x1024xi32>
    %c0_i32_2 = arith.constant 0 : i32
    %7 = arith.cmpi slt, %arg0, %c0_i32_2 : i32
    %8 = arith.extui %7 : i1 to i32
    %c0_i32_3 = arith.constant 0 : i32
    %9 = arith.cmpi ne, %8, %c0_i32_3 : i32
    scf.if %9 {
      %c0_8 = arith.constant 0 : index
      %c0_9 = arith.constant 0 : index
      %16 = vector.load %arg2[%c0_8, %c0_9] : memref<1024x32xf32, #tpu.memory_space<vmem>>, vector<1024x32xf32>
      %17 = arith.extui %6 : vector<8x1024xi1> to vector<8x1024xi32>
      %18 = arith.sitofp %17 : vector<8x1024xi32> to vector<8x1024xf32>
      %c0_10 = arith.constant 0 : index
      %c0_11 = arith.constant 0 : index
      %19 = vector.load %arg8[%c0_10, %c0_11] : memref<8x32xf32, #tpu.memory_space<vmem>>, vector<8x32xf32>
      %cst = arith.constant dense<0.000000e+00> : vector<8x32xf32>
      %20 = tpu.matmul %18, %16, %cst {dimension_numbers = #tpu.dot_dimension_numbers<[1], [0], [0], [1], [0, 0, 1, 1], [], []>} : vector<8x1024xf32>, vector<1024x32xf32>, vector<8x32xf32> -> vector<8x32xf32>
      %21 = arith.addf %19, %20 : vector<8x32xf32>
      %c0_12 = arith.constant 0 : index
      %c0_13 = arith.constant 0 : index
      %22 = vector.load %arg8[%c0_12, %c0_13] : memref<8x32xf32, #tpu.memory_space<vmem>>, vector<8x32xf32>
      tpu.vector_store %arg8[%c0_12, %c0_13], %21 {strides = array<i32>} : memref<8x32xf32, #tpu.memory_space<vmem>>, vector<8x32xf32>,
      %cst_14 = arith.constant 1.000000e+00 : f32
      %23 = vector.broadcast %cst_14 : f32 to vector<1024x1xf32>
      %c0_15 = arith.constant 0 : index
      %c0_16 = arith.constant 0 : index
      %24 = vector.load %arg9[%c0_15, %c0_16] : memref<8x1xf32, #tpu.memory_space<vmem>>, vector<8x1xf32>
      %cst_17 = arith.constant dense<0.000000e+00> : vector<8x1xf32>
      %25 = tpu.matmul %18, %23, %cst_17 {dimension_numbers = #tpu.dot_dimension_numbers<[1], [0], [0], [1], [0, 0, 1, 1], [], []>} : vector<8x1024xf32>, vector<1024x1xf32>, vector<8x1xf32> -> vector<8x1xf32>
      %26 = arith.addf %24, %25 : vector<8x1xf32>
      %c0_18 = arith.constant 0 : index
      %c0_19 = arith.constant 0 : index
      %27 = vector.load %arg9[%c0_18, %c0_19] : memref<8x1xf32, #tpu.memory_space<vmem>>, vector<8x1xf32>
      tpu.vector_store %arg9[%c0_18, %c0_19], %26 {strides = array<i32>} : memref<8x1xf32, #tpu.memory_space<vmem>>, vector<8x1xf32>,
    } else {
    }
    %c0_i32_4 = arith.constant 0 : i32
    %10 = arith.cmpi eq, %arg0, %c0_i32_4 : i32
    %11 = arith.extui %10 : i1 to i32
    %c0_i32_5 = arith.constant 0 : i32
    %12 = arith.cmpi ne, %11, %c0_i32_5 : i32
    scf.if %12 {
      %16 = tpu.iota {dimensions = array<i32: 1>} : vector<1x1024xi32>
      %c0_i32_8 = arith.constant 0 : i32
      %17 = vector.broadcast %c0_i32_8 : i32 to vector<1x1024xi32>
      %18 = arith.addi %16, %17 : vector<1x1024xi32>
      %c1000_i32 = arith.constant 1000 : i32
      %19 = vector.broadcast %c1000_i32 : i32 to vector<1x1024xi32>
      %20 = arith.cmpi slt, %18, %19 : vector<1x1024xi32>
      %21 = tpu.iota {dimensions = array<i32: 0>} : vector<1024x1xi32>
      %c0_i32_9 = arith.constant 0 : i32
      %22 = vector.broadcast %c0_i32_9 : i32 to vector<1024x1xi32>
      %23 = arith.addi %21, %22 : vector<1024x1xi32>
      %c1000_i32_10 = arith.constant 1000 : i32
      %24 = vector.broadcast %c1000_i32_10 : i32 to vector<1024x1xi32>
      %25 = arith.cmpi slt, %23, %24 : vector<1024x1xi32>
      %c0_11 = arith.constant 0 : index
      %c0_12 = arith.constant 0 : index
      %26 = vector.load %arg2[%c0_11, %c0_12] : memref<1024x32xf32, #tpu.memory_space<vmem>>, vector<1024x32xf32>
      %cst = arith.constant 0.000000e+00 : f32
      %27 = vector.shape_cast %25 : vector<1024x1xi1> to vector<1024x1xi1>
      %28 = vector.broadcast %27 : vector<1024x1xi1> to vector<1024x32xi1>
      %29 = vector.broadcast %cst : f32 to vector<1024x32xf32>
      %30 = arith.select %28, %26, %29 : vector<1024x32xi1>, vector<1024x32xf32>
      %31 = vector.broadcast %20 : vector<1x1024xi1> to vector<8x1024xi1>
      %32 = arith.andi %6, %31 : vector<8x1024xi1>
      %33 = arith.extui %32 : vector<8x1024xi1> to vector<8x1024xi32>
      %34 = arith.sitofp %33 : vector<8x1024xi32> to vector<8x1024xf32>
      %c0_13 = arith.constant 0 : index
      %c0_14 = arith.constant 0 : index
      %35 = vector.load %arg8[%c0_13, %c0_14] : memref<8x32xf32, #tpu.memory_space<vmem>>, vector<8x32xf32>
      %cst_15 = arith.constant dense<0.000000e+00> : vector<8x32xf32>
      %36 = tpu.matmul %34, %30, %cst_15 {dimension_numbers = #tpu.dot_dimension_numbers<[1], [0], [0], [1], [0, 0, 1, 1], [], []>} : vector<8x1024xf32>, vector<1024x32xf32>, vector<8x32xf32> -> vector<8x32xf32>
      %37 = arith.addf %35, %36 : vector<8x32xf32>
      %c0_16 = arith.constant 0 : index
      %c0_17 = arith.constant 0 : index
      %38 = vector.load %arg8[%c0_16, %c0_17] : memref<8x32xf32, #tpu.memory_space<vmem>>, vector<8x32xf32>
      tpu.vector_store %arg8[%c0_16, %c0_17], %37 {strides = array<i32>} : memref<8x32xf32, #tpu.memory_space<vmem>>, vector<8x32xf32>,
      %cst_18 = arith.constant 1.000000e+00 : f32
      %39 = vector.broadcast %cst_18 : f32 to vector<1024x1xf32>
      %c0_19 = arith.constant 0 : index
      %c0_20 = arith.constant 0 : index
      %40 = vector.load %arg9[%c0_19, %c0_20] : memref<8x1xf32, #tpu.memory_space<vmem>>, vector<8x1xf32>
      %cst_21 = arith.constant dense<0.000000e+00> : vector<8x1xf32>
      %41 = tpu.matmul %34, %39, %cst_21 {dimension_numbers = #tpu.dot_dimension_numbers<[1], [0], [0], [1], [0, 0, 1, 1], [], []>} : vector<8x1024xf32>, vector<1024x1xf32>, vector<8x1xf32> -> vector<8x1xf32>
      %42 = arith.addf %40, %41 : vector<8x1xf32>
      %c0_22 = arith.constant 0 : index
      %c0_23 = arith.constant 0 : index
      %43 = vector.load %arg9[%c0_22, %c0_23] : memref<8x1xf32, #tpu.memory_space<vmem>>, vector<8x1xf32>
      tpu.vector_store %arg9[%c0_22, %c0_23], %42 {strides = array<i32>} : memref<8x1xf32, #tpu.memory_space<vmem>>, vector<8x1xf32>,
    } else {
    }
    %c0_i32_6 = arith.constant 0 : i32
    %13 = arith.cmpi eq, %arg0, %c0_i32_6 : i32
    %14 = arith.extui %13 : i1 to i32
    %c0_i32_7 = arith.constant 0 : i32
    %15 = arith.cmpi ne, %14, %c0_i32_7 : i32
    scf.if %15 {
      %c0_8 = arith.constant 0 : index
      %c0_9 = arith.constant 0 : index
      %16 = vector.load %arg8[%c0_8, %c0_9] : memref<8x32xf32, #tpu.memory_space<vmem>>, vector<8x32xf32>
      %c0_10 = arith.constant 0 : index
      %c0_11 = arith.constant 0 : index
      %17 = vector.load %arg9[%c0_10, %c0_11] : memref<8x1xf32, #tpu.memory_space<vmem>>, vector<8x1xf32>
      %cst = arith.constant 1.000000e+00 : f32
      %18 = vector.broadcast %cst : f32 to vector<8x1xf32>
      %19 = arith.maximumf %17, %18 : vector<8x1xf32>
      %20 = vector.broadcast %19 : vector<8x1xf32> to vector<8x32xf32>
      %21 = arith.divf %16, %20 : vector<8x32xf32>
      %c0_12 = arith.constant 0 : index
      %c0_13 = arith.constant 0 : index
      %22 = vector.load %arg3[%c0_12, %c0_13] : memref<32x16xf32, #tpu.memory_space<vmem>>, vector<32x16xf32>
      %cst_14 = arith.constant dense<0.000000e+00> : vector<8x16xf32>
      %23 = tpu.matmul %21, %22, %cst_14 {dimension_numbers = #tpu.dot_dimension_numbers<[1], [0], [0], [1], [0, 0, 1, 1], [], []>} : vector<8x32xf32>, vector<32x16xf32>, vector<8x16xf32> -> vector<8x16xf32>
      %c0_15 = arith.constant 0 : index
      %c0_16 = arith.constant 0 : index
      %24 = vector.load %arg4[%c0_15, %c0_16] : memref<1x16xf32, #tpu.memory_space<vmem>>, vector<1x16xf32>
      %25 = vector.broadcast %24 : vector<1x16xf32> to vector<8x16xf32>
      %26 = arith.addf %23, %25 : vector<8x16xf32>
      %cst_17 = arith.constant 0.000000e+00 : f32
      %27 = vector.broadcast %cst_17 : f32 to vector<8x16xf32>
      %28 = arith.cmpf ogt, %26, %27 : vector<8x16xf32>
      %cst_18 = arith.constant 0.000000e+00 : f32
      %29 = vector.broadcast %cst_18 : f32 to vector<8x16xf32>
      %30 = arith.minimumf %26, %29 : vector<8x16xf32>
      %31 = math.exp %30 : vector<8x16xf32>
      %cst_19 = arith.constant 1.000000e+00 : f32
      %32 = vector.broadcast %cst_19 : f32 to vector<8x16xf32>
      %33 = arith.subf %31, %32 : vector<8x16xf32>
      %34 = arith.select %28, %26, %33 : vector<8x16xi1>, vector<8x16xf32>
      %c0_20 = arith.constant 0 : index
      %c0_21 = arith.constant 0 : index
      %35 = vector.load %arg5[%c0_20, %c0_21] : memref<16x4xf32, #tpu.memory_space<vmem>>, vector<16x4xf32>
      %cst_22 = arith.constant dense<0.000000e+00> : vector<8x4xf32>
      %36 = tpu.matmul %34, %35, %cst_22 {dimension_numbers = #tpu.dot_dimension_numbers<[1], [0], [0], [1], [0, 0, 1, 1], [], []>} : vector<8x16xf32>, vector<16x4xf32>, vector<8x4xf32> -> vector<8x4xf32>
      %c0_23 = arith.constant 0 : index
      %c0_24 = arith.constant 0 : index
      %37 = vector.load %arg6[%c0_23, %c0_24] : memref<1x4xf32, #tpu.memory_space<vmem>>, vector<1x4xf32>
      %38 = vector.broadcast %37 : vector<1x4xf32> to vector<8x4xf32>
      %39 = arith.addf %36, %38 : vector<8x4xf32>
      %c0_25 = arith.constant 0 : index
      %c0_26 = arith.constant 0 : index
      %40 = vector.load %arg7[%c0_25, %c0_26] : memref<8x4xf32, #tpu.memory_space<vmem>>, vector<8x4xf32>
      tpu.vector_store %arg7[%c0_25, %c0_26], %39 {strides = array<i32>} : memref<8x4xf32, #tpu.memory_space<vmem>>, vector<8x4xf32>,
    } else {
    }
    return
  }
  func.func @transform_0(%arg0: i32) -> (i32, i32) {
    %c0_i32 = arith.constant 0 : i32
    %c0_i32_0 = arith.constant 0 : i32
    return %c0_i32, %arg0 : i32, i32
  }
  func.func @transform_1(%arg0: i32) -> (i32, i32) {
    %c0_i32 = arith.constant 0 : i32
    %c0_i32_0 = arith.constant 0 : i32
    return %arg0, %c0_i32 : i32, i32
  }
  func.func @transform_2(%arg0: i32) -> (i32, i32) {
    %c0_i32 = arith.constant 0 : i32
    %c0_i32_0 = arith.constant 0 : i32
    %c0_i32_1 = arith.constant 0 : i32
    return %c0_i32, %c0_i32_0 : i32, i32
  }
  func.func @transform_3(%arg0: i32) -> (i32, i32) {
    %c0_i32 = arith.constant 0 : i32
    %c0_i32_0 = arith.constant 0 : i32
    %c0_i32_1 = arith.constant 0 : i32
    return %c0_i32, %c0_i32_0 : i32, i32
  }
  func.func @transform_4(%arg0: i32) -> (i32, i32) {
    %c0_i32 = arith.constant 0 : i32
    %c0_i32_0 = arith.constant 0 : i32
    %c0_i32_1 = arith.constant 0 : i32
    return %c0_i32, %c0_i32_0 : i32, i32
  }
  func.func @transform_5(%arg0: i32) -> (i32, i32) {
    %c0_i32 = arith.constant 0 : i32
    %c0_i32_0 = arith.constant 0 : i32
    %c0_i32_1 = arith.constant 0 : i32
    return %c0_i32, %c0_i32_0 : i32, i32
  }
  func.func @transform_6(%arg0: i32) -> (i32, i32) {
    %c0_i32 = arith.constant 0 : i32
    %c0_i32_0 = arith.constant 0 : i32
    %c0_i32_1 = arith.constant 0 : i32
    return %c0_i32, %c0_i32_0 : i32, i32
  }
}

</mosaic_0001>

<llo_original>
// kernel: tpu_custom_call.1
$region0: #{tpu_custom_call.1}
  #allocation0 [shape = 'u32[]', space=smem, size = 0x4, offset = 0x4, fixed_abs, tag = 'smem constant byte address 0x4 - core index']
  #allocation1 [shape = 'u32[72,128]{1,0:T(1,128)}', space=vmem, size = 0x9000, scoped, tag = 'internal scratch']
  #allocation2 [shape = 'f32[8,32]{1,0:T(8,128)}', space=vmem, size = 0x1000, scoped, tag = 'scratch operand']
  #allocation3 [shape = 'f32[8,1]{1,0:T(8,128)}', space=vmem, size = 0x1000, scoped, tag = 'scratch operand']
  %s0 = inlined_call_operand.vmem [shape: s32[1,1000], index: 0, kind: input, shape index: {}]
  %s1 = inlined_call_operand.vmem [shape: f32[1000,32], index: 1, kind: input, shape index: {}]
  %s2 = inlined_call_operand.vmem [shape: f32[32,16], index: 2, kind: input, shape index: {}]
  %s3 = inlined_call_operand.vmem [shape: f32[1,16], index: 3, kind: input, shape index: {}]
  %s4 = inlined_call_operand.vmem [shape: f32[16,4], index: 4, kind: input, shape index: {}]
  %s5 = inlined_call_operand.vmem [shape: f32[1,4], index: 5, kind: input, shape index: {}]
  %s6 = inlined_call_operand.vmem [shape: f32[8,4], index: 6, kind: output, shape index: {}]
  %s7 = sld [smem:[#allocation0]]
  $region46: #{tpu_custom_call.1} parent=0
    _
  %s9 = ssub.s32 1, %s7
  %s10 = scalar_select 0, %s9, %s7
  // Predicated region
  $region2: #{tpu_custom_call.1} parent=0 // pred_check
    _
  $region3: #{tpu_custom_call.1} parent=0 // pred_check_branch
    %12 = sbr.rel (0) target = $region5
  $region4: #{tpu_custom_call.1} parent=0 // pred_region
    _
  $region5: #{tpu_custom_call.1} parent=0 // pred_fallthru
    _
  // Predicated region
  $region6: #{tpu_custom_call.1} parent=0 // pred_check
    _
  $region7: #{tpu_custom_call.1} parent=0 // pred_check_branch
    %14 = sbr.rel (0) target = $region9
  $region8: #{tpu_custom_call.1} parent=0 // pred_region
    _
  $region9: #{tpu_custom_call.1} parent=0 // pred_fallthru
    _
  // Predicated region
  $region10: #{tpu_custom_call.1} parent=0 // pred_check
    _
  $region11: #{tpu_custom_call.1} parent=0 // pred_check_branch
    %16 = sbr.rel (0) target = $region13
  $region12: #{tpu_custom_call.1} parent=0 // pred_region
    _
  $region13: #{tpu_custom_call.1} parent=0 // pred_fallthru
    _
  // Predicated region
  $region14: #{tpu_custom_call.1} parent=0 // pred_check
    _
  $region15: #{tpu_custom_call.1} parent=0 // pred_check_branch
    %18 = sbr.rel (0) target = $region17
  $region16: #{tpu_custom_call.1} parent=0 // pred_region
    _
  $region17: #{tpu_custom_call.1} parent=0 // pred_fallthru
    _
  // Predicated region
  $region18: #{tpu_custom_call.1} parent=0 // pred_check
    _
  $region19: #{tpu_custom_call.1} parent=0 // pred_check_branch
    %20 = sbr.rel (0) target = $region21
  $region20: #{tpu_custom_call.1} parent=0 // pred_region
    _
  $region21: #{tpu_custom_call.1} parent=0 // pred_fallthru
    _
  // Predicated region
  $region22: #{tpu_custom_call.1} parent=0 // pred_check
    _
  $region23: #{tpu_custom_call.1} parent=0 // pred_check_branch
    %22 = sbr.rel (0) target = $region25
  $region24: #{tpu_custom_call.1} parent=0 // pred_region
    _
  $region25: #{tpu_custom_call.1} parent=0 // pred_fallthru
    _
  %p23 = scmp.eq.s32.totalorder 0, 0
  // Predicated region
  $region26: #{tpu_custom_call.1} parent=0 // pred_check
    %p24 = pneg %p23
  $region27: #{tpu_custom_call.1} parent=0 // pred_check_branch
    %26 = sbr.rel (%p24) target = $region29
  $region28: #{tpu_custom_call.1} parent=0 // pred_region
    %vm27 = vcmask 261120
    %28 = vst.msk [vmem:[#allocation2] sm:$0xff] %vm27, 0.0
    %vm29 = vcmask 7168
    %30 = vst.msk [vmem:[#allocation3] sm:$0xff] %vm29, 0.0
  $region29: #{tpu_custom_call.1} parent=0 // pred_fallthru
    _
  %v31 = vld [vmem:[%s0] sm:$0xff]
  %v32 = vlaneseq
  %v33 = vshrl.u32 %v32, 7
  %v34 = vperm.slane %v31, 0
  %v35 = vperm.slane %v31, 1
  %v36 = vperm.slane %v31, 2
  %v37 = vperm.slane %v31, 3
  %v38 = vperm.slane %v31, 4
  %v39 = vperm.slane %v31, 5
  %v40 = vperm.slane %v31, 6
  %v41 = vperm.slane %v31, 7
  %vm42 = vcmp.eq.s32.totalorder %v33, %v34
  %vm43 = vcmp.eq.s32.totalorder %v33, %v35
  %vm44 = vcmp.eq.s32.totalorder %v33, %v36
  %vm45 = vcmp.eq.s32.totalorder %v33, %v37
  %vm46 = vcmp.eq.s32.totalorder %v33, %v38
  %vm47 = vcmp.eq.s32.totalorder %v33, %v39
  %vm48 = vcmp.eq.s32.totalorder %v33, %v40
  %vm49 = vcmp.eq.s32.totalorder %v33, %v41
  %p50 = scmp.lt.s32.totalorder 0, 0
  // Predicated region
  $region30: #{tpu_custom_call.1} parent=0 // pred_check
    %p51 = pneg %p50
  $region31: #{tpu_custom_call.1} parent=0 // pred_check_branch
    %53 = sbr.rel (%p51) target = $region33
  $region32: #{tpu_custom_call.1} parent=0 // pred_region
    %v54 = vld [vmem:[%s1] sm:$0xff]
    %v55 = vld [vmem:[%s1 + $0x8] sm:$0xff]
    %v56 = vld [vmem:[%s1 + $0x10] sm:$0xff]
    %v57 = vld [vmem:[%s1 + $0x18] sm:$0xff]
    %v58 = vld [vmem:[%s1 + $0x20] sm:$0xff]
    %v59 = vld [vmem:[%s1 + $0x28] sm:$0xff]
    %v60 = vld [vmem:[%s1 + $0x30] sm:$0xff]
    %v61 = vld [vmem:[%s1 + $0x38] sm:$0xff]
    %v62 = vld [vmem:[%s1 + $0x40] sm:$0xff]
    %v63 = vld [vmem:[%s1 + $0x48] sm:$0xff]
    %v64 = vld [vmem:[%s1 + $0x50] sm:$0xff]
    %v65 = vld [vmem:[%s1 + $0x58] sm:$0xff]
    %v66 = vld [vmem:[%s1 + $0x60] sm:$0xff]
    %v67 = vld [vmem:[%s1 + $0x68] sm:$0xff]
    %v68 = vld [vmem:[%s1 + $0x70] sm:$0xff]
    %v69 = vld [vmem:[%s1 + $0x78] sm:$0xff]
    %v70 = vld [vmem:[%s1 + $0x80] sm:$0xff]
    %v71 = vld [vmem:[%s1 + $0x88] sm:$0xff]
    %v72 = vld [vmem:[%s1 + $0x90] sm:$0xff]
    %v73 = vld [vmem:[%s1 + $0x98] sm:$0xff]
    %v74 = vld [vmem:[%s1 + $0xa0] sm:$0xff]
    %v75 = vld [vmem:[%s1 + $0xa8] sm:$0xff]
    %v76 = vld [vmem:[%s1 + $0xb0] sm:$0xff]
    %v77 = vld [vmem:[%s1 + $0xb8] sm:$0xff]
    %v78 = vld [vmem:[%s1 + $0xc0] sm:$0xff]
    %v79 = vld [vmem:[%s1 + $0xc8] sm:$0xff]
    %v80 = vld [vmem:[%s1 + $0xd0] sm:$0xff]
    %v81 = vld [vmem:[%s1 + $0xd8] sm:$0xff]
    %v82 = vld [vmem:[%s1 + $0xe0] sm:$0xff]
    %v83 = vld [vmem:[%s1 + $0xe8] sm:$0xff]
    %v84 = vld [vmem:[%s1 + $0xf0] sm:$0xff]
    %v85 = vld [vmem:[%s1 + $0xf8] sm:$0xff]
    %v86 = vld [vmem:[%s1 + $0x100] sm:$0xff]
    %v87 = vld [vmem:[%s1 + $0x108] sm:$0xff]
    %v88 = vld [vmem:[%s1 + $0x110] sm:$0xff]
    %v89 = vld [vmem:[%s1 + $0x118] sm:$0xff]
    %v90 = vld [vmem:[%s1 + $0x120] sm:$0xff]
    %v91 = vld [vmem:[%s1 + $0x128] sm:$0xff]
    %v92 = vld [vmem:[%s1 + $0x130] sm:$0xff]
    %v93 = vld [vmem:[%s1 + $0x138] sm:$0xff]
    %v94 = vld [vmem:[%s1 + $0x140] sm:$0xff]
    %v95 = vld [vmem:[%s1 + $0x148] sm:$0xff]
    %v96 = vld [vmem:[%s1 + $0x150] sm:$0xff]
    %v97 = vld [vmem:[%s1 + $0x158] sm:$0xff]
    %v98 = vld [vmem:[%s1 + $0x160] sm:$0xff]
    %v99 = vld [vmem:[%s1 + $0x168] sm:$0xff]
    %v100 = vld [vmem:[%s1 + $0x170] sm:$0xff]
    %v101 = vld [vmem:[%s1 + $0x178] sm:$0xff]
    %v102 = vld [vmem:[%s1 + $0x180] sm:$0xff]
    %v103 = vld [vmem:[%s1 + $0x188] sm:$0xff]
    %v104 = vld [vmem:[%s1 + $0x190] sm:$0xff]
    %v105 = vld [vmem:[%s1 + $0x198] sm:$0xff]
    %v106 = vld [vmem:[%s1 + $0x1a0] sm:$0xff]
    %v107 = vld [vmem:[%s1 + $0x1a8] sm:$0xff]
    %v108 = vld [vmem:[%s1 + $0x1b0] sm:$0xff]
    %v109 = vld [vmem:[%s1 + $0x1b8] sm:$0xff]
    %v110 = vld [vmem:[%s1 + $0x1c0] sm:$0xff]
    %v111 = vld [vmem:[%s1 + $0x1c8] sm:$0xff]
    %v112 = vld [vmem:[%s1 + $0x1d0] sm:$0xff]
    %v113 = vld [vmem:[%s1 + $0x1d8] sm:$0xff]
    %v114 = vld [vmem:[%s1 + $0x1e0] sm:$0xff]
    %v115 = vld [vmem:[%s1 + $0x1e8] sm:$0xff]
    %v116 = vld [vmem:[%s1 + $0x1f0] sm:$0xff]
    %v117 = vld [vmem:[%s1 + $0x1f8] sm:$0xff]
    %v118 = vld [vmem:[%s1 + $0x200] sm:$0xff]
    %v119 = vld [vmem:[%s1 + $0x208] sm:$0xff]
    %v120 = vld [vmem:[%s1 + $0x210] sm:$0xff]
    %v121 = vld [vmem:[%s1 + $0x218] sm:$0xff]
    %v122 = vld [vmem:[%s1 + $0x220] sm:$0xff]
    %v123 = vld [vmem:[%s1 + $0x228] sm:$0xff]
    %v124 = vld [vmem:[%s1 + $0x230] sm:$0xff]
    %v125 = vld [vmem:[%s1 + $0x238] sm:$0xff]
    %v126 = vld [vmem:[%s1 + $0x240] sm:$0xff]
    %v127 = vld [vmem:[%s1 + $0x248] sm:$0xff]
    %v128 = vld [vmem:[%s1 + $0x250] sm:$0xff]
    %v129 = vld [vmem:[%s1 + $0x258] sm:$0xff]
    %v130 = vld [vmem:[%s1 + $0x260] sm:$0xff]
    %v131 = vld [vmem:[%s1 + $0x268] sm:$0xff]
    %v132 = vld [vmem:[%s1 + $0x270] sm:$0xff]
    %v133 = vld [vmem:[%s1 + $0x278] sm:$0xff]
    %v134 = vld [vmem:[%s1 + $0x280] sm:$0xff]
    %v135 = vld [vmem:[%s1 + $0x288] sm:$0xff]
    %v136 = vld [vmem:[%s1 + $0x290] sm:$0xff]
    %v137 = vld [vmem:[%s1 + $0x298] sm:$0xff]
    %v138 = vld [vmem:[%s1 + $0x2a0] sm:$0xff]
    %v139 = vld [vmem:[%s1 + $0x2a8] sm:$0xff]
    %v140 = vld [vmem:[%s1 + $0x2b0] sm:$0xff]
    %v141 = vld [vmem:[%s1 + $0x2b8] sm:$0xff]
    %v142 = vld [vmem:[%s1 + $0x2c0] sm:$0xff]
    %v143 = vld [vmem:[%s1 + $0x2c8] sm:$0xff]
    %v144 = vld [vmem:[%s1 + $0x2d0] sm:$0xff]
    %v145 = vld [vmem:[%s1 + $0x2d8] sm:$0xff]
    %v146 = vld [vmem:[%s1 + $0x2e0] sm:$0xff]
    %v147 = vld [vmem:[%s1 + $0x2e8] sm:$0xff]
    %v148 = vld [vmem:[%s1 + $0x2f0] sm:$0xff]
    %v149 = vld [vmem:[%s1 + $0x2f8] sm:$0xff]
    %v150 = vld [vmem:[%s1 + $0x300] sm:$0xff]
    %v151 = vld [vmem:[%s1 + $0x308] sm:$0xff]
    %v152 = vld [vmem:[%s1 + $0x310] sm:$0xff]
    %v153 = vld [vmem:[%s1 + $0x318] sm:$0xff]
    %v154 = vld [vmem:[%s1 + $0x320] sm:$0xff]
    %v155 = vld [vmem:[%s1 + $0x328] sm:$0xff]
    %v156 = vld [vmem:[%s1 + $0x330] sm:$0xff]
    %v157 = vld [vmem:[%s1 + $0x338] sm:$0xff]
    %v158 = vld [vmem:[%s1 + $0x340] sm:$0xff]
    %v159 = vld [vmem:[%s1 + $0x348] sm:$0xff]
    %v160 = vld [vmem:[%s1 + $0x350] sm:$0xff]
    %v161 = vld [vmem:[%s1 + $0x358] sm:$0xff]
    %v162 = vld [vmem:[%s1 + $0x360] sm:$0xff]
    %v163 = vld [vmem:[%s1 + $0x368] sm:$0xff]
    %v164 = vld [vmem:[%s1 + $0x370] sm:$0xff]
    %v165 = vld [vmem:[%s1 + $0x378] sm:$0xff]
    %v166 = vld [vmem:[%s1 + $0x380] sm:$0xff]
    %v167 = vld [vmem:[%s1 + $0x388] sm:$0xff]
    %v168 = vld [vmem:[%s1 + $0x390] sm:$0xff]
    %v169 = vld [vmem:[%s1 + $0x398] sm:$0xff]
    %v170 = vld [vmem:[%s1 + $0x3a0] sm:$0xff]
    %v171 = vld [vmem:[%s1 + $0x3a8] sm:$0xff]
    %v172 = vld [vmem:[%s1 + $0x3b0] sm:$0xff]
    %v173 = vld [vmem:[%s1 + $0x3b8] sm:$0xff]
    %v174 = vld [vmem:[%s1 + $0x3c0] sm:$0xff]
    %v175 = vld [vmem:[%s1 + $0x3c8] sm:$0xff]
    %v176 = vld [vmem:[%s1 + $0x3d0] sm:$0xff]
    %v177 = vld [vmem:[%s1 + $0x3d8] sm:$0xff]
    %v178 = vld [vmem:[%s1 + $0x3e0] sm:$0xff]
    %v179 = vld [vmem:[%s1 + $0x3e8] sm:$0xff]
    %v180 = vld [vmem:[%s1 + $0x3f0] sm:$0xff]
    %v181 = vld [vmem:[%s1 + $0x3f8] sm:$0xff]
    %v182 = vsel %vm42, 1, 0
    %v183 = vsel %vm43, 1, 0
    %v184 = vsel %vm44, 1, 0
    %v185 = vsel %vm45, 1, 0
    %v186 = vsel %vm46, 1, 0
    %v187 = vsel %vm47, 1, 0
    %v188 = vsel %vm48, 1, 0
    %v189 = vsel %vm49, 1, 0
    %v190 = vcvt.s32.f32 %v182
    %v191 = vcvt.s32.f32 %v183
    %v192 = vcvt.s32.f32 %v184
    %v193 = vcvt.s32.f32 %v185
    %v194 = vcvt.s32.f32 %v186
    %v195 = vcvt.s32.f32 %v187
    %v196 = vcvt.s32.f32 %v188
    %v197 = vcvt.s32.f32 %v189
    %v198 = vld [vmem:[#allocation2] sm:$0xff]
    %199 = vmatpush.msra.mxu0 %v69
    %200 = vmatpush.msra.mxu0 %v68
    %201 = vmatpush.msra.mxu0 %v67
    %202 = vmatpush.msra.mxu0 %v66
    %203 = vmatpush.msra.mxu0 %v65
    %204 = vmatpush.msra.mxu0 %v64
    %205 = vmatpush.msra.mxu0 %v63
    %206 = vmatpush.msra.mxu0 %v62
    %207 = vmatpush.msra.mxu0 %v61
    %208 = vmatpush.msra.mxu0 %v60
    %209 = vmatpush.msra.mxu0 %v59
    %210 = vmatpush.msra.mxu0 %v58
    %211 = vmatpush.msra.mxu0 %v57
    %212 = vmatpush.msra.mxu0 %v56
    %213 = vmatpush.msra.mxu0 %v55
    %214 = vmatpush.msra.mxu0 %v54
    %215 = vmatmul.f32.gmra.mxu0 %v190
    %v216 = vpop.f32.mrf.mxu0
    %v217 = vadd.f32 0.0, %v216
    %218 = vdwg.mxu0
    %219 = vmatpush.msra.mxu0 %v85
    %220 = vmatpush.msra.mxu0 %v84
    %221 = vmatpush.msra.mxu0 %v83
    %222 = vmatpush.msra.mxu0 %v82
    %223 = vmatpush.msra.mxu0 %v81
    %224 = vmatpush.msra.mxu0 %v80
    %225 = vmatpush.msra.mxu0 %v79
    %226 = vmatpush.msra.mxu0 %v78
    %227 = vmatpush.msra.mxu0 %v77
    %228 = vmatpush.msra.mxu0 %v76
    %229 = vmatpush.msra.mxu0 %v75
    %230 = vmatpush.msra.mxu0 %v74
    %231 = vmatpush.msra.mxu0 %v73
    %232 = vmatpush.msra.mxu0 %v72
    %233 = vmatpush.msra.mxu0 %v71
    %234 = vmatpush.msra.mxu0 %v70
    %235 = vmatmul.f32.gmra.mxu0 %v191
    %v236 = vpop.f32.mrf.mxu0
    %v237 = vadd.f32 %v217, %v236
    %238 = vdwg.mxu0
    %239 = vmatpush.msra.mxu0 %v101
    %240 = vmatpush.msra.mxu0 %v100
    %241 = vmatpush.msra.mxu0 %v99
    %242 = vmatpush.msra.mxu0 %v98
    %243 = vmatpush.msra.mxu0 %v97
    %244 = vmatpush.msra.mxu0 %v96
    %245 = vmatpush.msra.mxu0 %v95
    %246 = vmatpush.msra.mxu0 %v94
    %247 = vmatpush.msra.mxu0 %v93
    %248 = vmatpush.msra.mxu0 %v92
    %249 = vmatpush.msra.mxu0 %v91
    %250 = vmatpush.msra.mxu0 %v90
    %251 = vmatpush.msra.mxu0 %v89
    %252 = vmatpush.msra.mxu0 %v88
    %253 = vmatpush.msra.mxu0 %v87
    %254 = vmatpush.msra.mxu0 %v86
    %255 = vmatmul.f32.gmra.mxu0 %v192
    %v256 = vpop.f32.mrf.mxu0
    %v257 = vadd.f32 %v237, %v256
    %258 = vdwg.mxu0
    %259 = vmatpush.msra.mxu0 %v117
    %260 = vmatpush.msra.mxu0 %v116
    %261 = vmatpush.msra.mxu0 %v115
    %262 = vmatpush.msra.mxu0 %v114
    %263 = vmatpush.msra.mxu0 %v113
    %264 = vmatpush.msra.mxu0 %v112
    %265 = vmatpush.msra.mxu0 %v111
    %266 = vmatpush.msra.mxu0 %v110
    %267 = vmatpush.msra.mxu0 %v109
    %268 = vmatpush.msra.mxu0 %v108
    %269 = vmatpush.msra.mxu0 %v107
    %270 = vmatpush.msra.mxu0 %v106
    %271 = vmatpush.msra.mxu0 %v105
    %272 = vmatpush.msra.mxu0 %v104
    %273 = vmatpush.msra.mxu0 %v103
    %274 = vmatpush.msra.mxu0 %v102
    %275 = vmatmul.f32.gmra.mxu0 %v193
    %v276 = vpop.f32.mrf.mxu0
    %v277 = vadd.f32 %v257, %v276
    %278 = vdwg.mxu0
    %279 = vmatpush.msra.mxu0 %v133
    %280 = vmatpush.msra.mxu0 %v132
    %281 = vmatpush.msra.mxu0 %v131
    %282 = vmatpush.msra.mxu0 %v130
    %283 = vmatpush.msra.mxu0 %v129
    %284 = vmatpush.msra.mxu0 %v128
    %285 = vmatpush.msra.mxu0 %v127
    %286 = vmatpush.msra.mxu0 %v126
    %287 = vmatpush.msra.mxu0 %v125
    %288 = vmatpush.msra.mxu0 %v124
    %289 = vmatpush.msra.mxu0 %v123
    %290 = vmatpush.msra.mxu0 %v122
    %291 = vmatpush.msra.mxu0 %v121
    %292 = vmatpush.msra.mxu0 %v120
    %293 = vmatpush.msra.mxu0 %v119
    %294 = vmatpush.msra.mxu0 %v118
    %295 = vmatmul.f32.gmra.mxu0 %v194
    %v296 = vpop.f32.mrf.mxu0
    %v297 = vadd.f32 %v277, %v296
    %298 = vdwg.mxu0
    %299 = vmatpush.msra.mxu0 %v149
    %300 = vmatpush.msra.mxu0 %v148
    %301 = vmatpush.msra.mxu0 %v147
    %302 = vmatpush.msra.mxu0 %v146
    %303 = vmatpush.msra.mxu0 %v145
    %304 = vmatpush.msra.mxu0 %v144
    %305 = vmatpush.msra.mxu0 %v143
    %306 = vmatpush.msra.mxu0 %v142
    %307 = vmatpush.msra.mxu0 %v141
    %308 = vmatpush.msra.mxu0 %v140
    %309 = vmatpush.msra.mxu0 %v139
    %310 = vmatpush.msra.mxu0 %v138
    %311 = vmatpush.msra.mxu0 %v137
    %312 = vmatpush.msra.mxu0 %v136
    %313 = vmatpush.msra.mxu0 %v135
    %314 = vmatpush.msra.mxu0 %v134
    %315 = vmatmul.f32.gmra.mxu0 %v195
    %v316 = vpop.f32.mrf.mxu0
    %v317 = vadd.f32 %v297, %v316
    %318 = vdwg.mxu0
    %319 = vmatpush.msra.mxu0 %v165
    %320 = vmatpush.msra.mxu0 %v164
    %321 = vmatpush.msra.mxu0 %v163
    %322 = vmatpush.msra.mxu0 %v162
    %323 = vmatpush.msra.mxu0 %v161
    %324 = vmatpush.msra.mxu0 %v160
    %325 = vmatpush.msra.mxu0 %v159
    %326 = vmatpush.msra.mxu0 %v158
    %327 = vmatpush.msra.mxu0 %v157
    %328 = vmatpush.msra.mxu0 %v156
    %329 = vmatpush.msra.mxu0 %v155
    %330 = vmatpush.msra.mxu0 %v154
    %331 = vmatpush.msra.mxu0 %v153
    %332 = vmatpush.msra.mxu0 %v152
    %333 = vmatpush.msra.mxu0 %v151
    %334 = vmatpush.msra.mxu0 %v150
    %335 = vmatmul.f32.gmra.mxu0 %v196
    %v336 = vpop.f32.mrf.mxu0
    %v337 = vadd.f32 %v317, %v336
    %338 = vdwg.mxu0
    %339 = vmatpush.msra.mxu0 %v181
    %340 = vmatpush.msra.mxu0 %v180
    %341 = vmatpush.msra.mxu0 %v179
    %342 = vmatpush.msra.mxu0 %v178
    %343 = vmatpush.msra.mxu0 %v177
    %344 = vmatpush.msra.mxu0 %v176
    %345 = vmatpush.msra.mxu0 %v175
    %346 = vmatpush.msra.mxu0 %v174
    %347 = vmatpush.msra.mxu0 %v173
    %348 = vmatpush.msra.mxu0 %v172
    %349 = vmatpush.msra.mxu0 %v171
    %350 = vmatpush.msra.mxu0 %v170
    %351 = vmatpush.msra.mxu0 %v169
    %352 = vmatpush.msra.mxu0 %v168
    %353 = vmatpush.msra.mxu0 %v167
    %354 = vmatpush.msra.mxu0 %v166
    %355 = vmatmul.f32.gmra.mxu0 %v197
    %v356 = vpop.f32.mrf.mxu0
    %v357 = vadd.f32 %v337, %v356
    %358 = vdwg.mxu0
    %v359 = vadd.f32 %v198, %v357
    %vm360 = vcmask 261120
    %361 = vst.msk [vmem:[#allocation2] sm:$0xff] %vm360, %v359
    %v362 = vld [vmem:[#allocation3] sm:$0xff]
    %363 = vmatpush.msra.mxu0 1.0
    %364 = vmatpush.msra.mxu0 1.0
    %365 = vmatpush.msra.mxu0 1.0
    %366 = vmatpush.msra.mxu0 1.0
    %367 = vmatpush.msra.mxu0 1.0
    %368 = vmatpush.msra.mxu0 1.0
    %369 = vmatpush.msra.mxu0 1.0
    %370 = vmatpush.msra.mxu0 1.0
    %371 = vmatpush.msra.mxu0 1.0
    %372 = vmatpush.msra.mxu0 1.0
    %373 = vmatpush.msra.mxu0 1.0
    %374 = vmatpush.msra.mxu0 1.0
    %375 = vmatpush.msra.mxu0 1.0
    %376 = vmatpush.msra.mxu0 1.0
    %377 = vmatpush.msra.mxu0 1.0
    %378 = vmatpush.msra.mxu0 1.0
    %379 = vmatmul.f32.gmra.mxu0 %v190
    %v380 = vpop.f32.mrf.mxu0
    %v381 = vadd.f32 0.0, %v380
    %382 = vdwg.mxu0
    %383 = vmatpush.msra.mxu0 1.0
    %384 = vmatpush.msra.mxu0 1.0
    %385 = vmatpush.msra.mxu0 1.0
    %386 = vmatpush.msra.mxu0 1.0
    %387 = vmatpush.msra.mxu0 1.0
    %388 = vmatpush.msra.mxu0 1.0
    %389 = vmatpush.msra.mxu0 1.0
    %390 = vmatpush.msra.mxu0 1.0
    %391 = vmatpush.msra.mxu0 1.0
    %392 = vmatpush.msra.mxu0 1.0
    %393 = vmatpush.msra.mxu0 1.0
    %394 = vmatpush.msra.mxu0 1.0
    %395 = vmatpush.msra.mxu0 1.0
    %396 = vmatpush.msra.mxu0 1.0
    %397 = vmatpush.msra.mxu0 1.0
    %398 = vmatpush.msra.mxu0 1.0
    %399 = vmatmul.f32.gmra.mxu0 %v191
    %v400 = vpop.f32.mrf.mxu0
    %v401 = vadd.f32 %v381, %v400
    %402 = vdwg.mxu0
    %403 = vmatpush.msra.mxu0 1.0
    %404 = vmatpush.msra.mxu0 1.0
    %405 = vmatpush.msra.mxu0 1.0
    %406 = vmatpush.msra.mxu0 1.0
    %407 = vmatpush.msra.mxu0 1.0
    %408 = vmatpush.msra.mxu0 1.0
    %409 = vmatpush.msra.mxu0 1.0
    %410 = vmatpush.msra.mxu0 1.0
    %411 = vmatpush.msra.mxu0 1.0
    %412 = vmatpush.msra.mxu0 1.0
    %413 = vmatpush.msra.mxu0 1.0
    %414 = vmatpush.msra.mxu0 1.0
    %415 = vmatpush.msra.mxu0 1.0
    %416 = vmatpush.msra.mxu0 1.0
    %417 = vmatpush.msra.mxu0 1.0
    %418 = vmatpush.msra.mxu0 1.0
    %419 = vmatmul.f32.gmra.mxu0 %v192
    %v420 = vpop.f32.mrf.mxu0
    %v421 = vadd.f32 %v401, %v420
    %422 = vdwg.mxu0
    %423 = vmatpush.msra.mxu0 1.0
    %424 = vmatpush.msra.mxu0 1.0
    %425 = vmatpush.msra.mxu0 1.0
    %426 = vmatpush.msra.mxu0 1.0
    %427 = vmatpush.msra.mxu0 1.0
    %428 = vmatpush.msra.mxu0 1.0
    %429 = vmatpush.msra.mxu0 1.0
    %430 = vmatpush.msra.mxu0 1.0
    %431 = vmatpush.msra.mxu0 1.0
    %432 = vmatpush.msra.mxu0 1.0
    %433 = vmatpush.msra.mxu0 1.0
    %434 = vmatpush.msra.mxu0 1.0
    %435 = vmatpush.msra.mxu0 1.0
    %436 = vmatpush.msra.mxu0 1.0
    %437 = vmatpush.msra.mxu0 1.0
    %438 = vmatpush.msra.mxu0 1.0
    %439 = vmatmul.f32.gmra.mxu0 %v193
    %v440 = vpop.f32.mrf.mxu0
    %v441 = vadd.f32 %v421, %v440
    %442 = vdwg.mxu0
    %443 = vmatpush.msra.mxu0 1.0
    %444 = vmatpush.msra.mxu0 1.0
    %445 = vmatpush.msra.mxu0 1.0
    %446 = vmatpush.msra.mxu0 1.0
    %447 = vmatpush.msra.mxu0 1.0
    %448 = vmatpush.msra.mxu0 1.0
    %449 = vmatpush.msra.mxu0 1.0
    %450 = vmatpush.msra.mxu0 1.0
    %451 = vmatpush.msra.mxu0 1.0
    %452 = vmatpush.msra.mxu0 1.0
    %453 = vmatpush.msra.mxu0 1.0
    %454 = vmatpush.msra.mxu0 1.0
    %455 = vmatpush.msra.mxu0 1.0
    %456 = vmatpush.msra.mxu0 1.0
    %457 = vmatpush.msra.mxu0 1.0
    %458 = vmatpush.msra.mxu0 1.0
    %459 = vmatmul.f32.gmra.mxu0 %v194
    %v460 = vpop.f32.mrf.mxu0
    %v461 = vadd.f32 %v441, %v460
    %462 = vdwg.mxu0
    %463 = vmatpush.msra.mxu0 1.0
    %464 = vmatpush.msra.mxu0 1.0
    %465 = vmatpush.msra.mxu0 1.0
    %466 = vmatpush.msra.mxu0 1.0
    %467 = vmatpush.msra.mxu0 1.0
    %468 = vmatpush.msra.mxu0 1.0
    %469 = vmatpush.msra.mxu0 1.0
    %470 = vmatpush.msra.mxu0 1.0
    %471 = vmatpush.msra.mxu0 1.0
    %472 = vmatpush.msra.mxu0 1.0
    %473 = vmatpush.msra.mxu0 1.0
    %474 = vmatpush.msra.mxu0 1.0
    %475 = vmatpush.msra.mxu0 1.0
    %476 = vmatpush.msra.mxu0 1.0
    %477 = vmatpush.msra.mxu0 1.0
    %478 = vmatpush.msra.mxu0 1.0
    %479 = vmatmul.f32.gmra.mxu0 %v195
    %v480 = vpop.f32.mrf.mxu0
    %v481 = vadd.f32 %v461, %v480
    %482 = vdwg.mxu0
    %483 = vmatpush.msra.mxu0 1.0
    %484 = vmatpush.msra.mxu0 1.0
    %485 = vmatpush.msra.mxu0 1.0
    %486 = vmatpush.msra.mxu0 1.0
    %487 = vmatpush.msra.mxu0 1.0
    %488 = vmatpush.msra.mxu0 1.0
    %489 = vmatpush.msra.mxu0 1.0
    %490 = vmatpush.msra.mxu0 1.0
    %491 = vmatpush.msra.mxu0 1.0
    %492 = vmatpush.msra.mxu0 1.0
    %493 = vmatpush.msra.mxu0 1.0
    %494 = vmatpush.msra.mxu0 1.0
    %495 = vmatpush.msra.mxu0 1.0
    %496 = vmatpush.msra.mxu0 1.0
    %497 = vmatpush.msra.mxu0 1.0
    %498 = vmatpush.msra.mxu0 1.0
    %499 = vmatmul.f32.gmra.mxu0 %v196
    %v500 = vpop.f32.mrf.mxu0
    %v501 = vadd.f32 %v481, %v500
    %502 = vdwg.mxu0
    %503 = vmatpush.msra.mxu0 1.0
    %504 = vmatpush.msra.mxu0 1.0
    %505 = vmatpush.msra.mxu0 1.0
    %506 = vmatpush.msra.mxu0 1.0
    %507 = vmatpush.msra.mxu0 1.0
    %508 = vmatpush.msra.mxu0 1.0
    %509 = vmatpush.msra.mxu0 1.0
    %510 = vmatpush.msra.mxu0 1.0
    %511 = vmatpush.msra.mxu0 1.0
    %512 = vmatpush.msra.mxu0 1.0
    %513 = vmatpush.msra.mxu0 1.0
    %514 = vmatpush.msra.mxu0 1.0
    %515 = vmatpush.msra.mxu0 1.0
    %516 = vmatpush.msra.mxu0 1.0
    %517 = vmatpush.msra.mxu0 1.0
    %518 = vmatpush.msra.mxu0 1.0
    %519 = vmatmul.f32.gmra.mxu0 %v197
    %v520 = vpop.f32.mrf.mxu0
    %v521 = vadd.f32 %v501, %v520
    %522 = vdwg.mxu0
    %v523 = vadd.f32 %v362, %v521
    %vm524 = vcmask 7168
    %525 = vst.msk [vmem:[#allocation3] sm:$0xff] %vm524, %v523
  $region33: #{tpu_custom_call.1} parent=0 // pred_fallthru
    _
  // Predicated region
  $region34: #{tpu_custom_call.1} parent=0 // pred_check
    %p526 = pneg %p23
  $region35: #{tpu_custom_call.1} parent=0 // pred_check_branch
    %528 = sbr.rel (%p526) target = $region37
  $region36: #{tpu_custom_call.1} parent=0 // pred_region
    %v529 = vlaneseq
    %v530 = vand.u32 %v529, 127
    %v531 = vadd.s32 %v530, 128
    %v532 = vadd.s32 %v530, 256
    %v533 = vadd.s32 %v530, 384
    %v534 = vadd.s32 %v530, 512
    %v535 = vadd.s32 %v530, 640
    %v536 = vadd.s32 %v530, 768
    %v537 = vadd.s32 %v530, 896
    %vm538 = vcmp.lt.s32.totalorder %v530, 1000
    %vm539 = vcmp.lt.s32.totalorder %v531, 1000
    %vm540 = vcmp.lt.s32.totalorder %v532, 1000
    %vm541 = vcmp.lt.s32.totalorder %v533, 1000
    %vm542 = vcmp.lt.s32.totalorder %v534, 1000
    %vm543 = vcmp.lt.s32.totalorder %v535, 1000
    %vm544 = vcmp.lt.s32.totalorder %v536, 1000
    %vm545 = vcmp.lt.s32.totalorder %v537, 1000
    %v546 = vadd.s32 %v33, 8
    %v547 = vadd.s32 %v33, 16
    %v548 = vadd.s32 %v33, 24
    %v549 = vadd.s32 %v33, 32
    %v550 = vadd.s32 %v33, 40
    %v551 = vadd.s32 %v33, 48
    %v552 = vadd.s32 %v33, 56
    %v553 = vadd.s32 %v33, 64
    %v554 = vadd.s32 %v33, 72
    %v555 = vadd.s32 %v33, 80
    %v556 = vadd.s32 %v33, 88
    %v557 = vadd.s32 %v33, 96
    %v558 = vadd.s32 %v33, 104
    %v559 = vadd.s32 %v33, 112
    %v560 = vadd.s32 %v33, 120
    %v561 = vadd.s32 %v33, 128
    %v562 = vadd.s32 %v33, 136
    %v563 = vadd.s32 %v33, 144
    %v564 = vadd.s32 %v33, 152
    %v565 = vadd.s32 %v33, 160
    %v566 = vadd.s32 %v33, 168
    %v567 = vadd.s32 %v33, 176
    %v568 = vadd.s32 %v33, 184
    %v569 = vadd.s32 %v33, 192
    %v570 = vadd.s32 %v33, 200
    %v571 = vadd.s32 %v33, 208
    %v572 = vadd.s32 %v33, 216
    %v573 = vadd.s32 %v33, 224
    %v574 = vadd.s32 %v33, 232
    %v575 = vadd.s32 %v33, 240
    %v576 = vadd.s32 %v33, 248
    %v577 = vadd.s32 %v33, 256
    %v578 = vadd.s32 %v33, 264
    %v579 = vadd.s32 %v33, 272
    %v580 = vadd.s32 %v33, 280
    %v581 = vadd.s32 %v33, 288
    %v582 = vadd.s32 %v33, 296
    %v583 = vadd.s32 %v33, 304
    %v584 = vadd.s32 %v33, 312
    %v585 = vadd.s32 %v33, 320
    %v586 = vadd.s32 %v33, 328
    %v587 = vadd.s32 %v33, 336
    %v588 = vadd.s32 %v33, 344
    %v589 = vadd.s32 %v33, 352
    %v590 = vadd.s32 %v33, 360
    %v591 = vadd.s32 %v33, 368
    %v592 = vadd.s32 %v33, 376
    %v593 = vadd.s32 %v33, 384
    %v594 = vadd.s32 %v33, 392
    %v595 = vadd.s32 %v33, 400
    %v596 = vadd.s32 %v33, 408
    %v597 = vadd.s32 %v33, 416
    %v598 = vadd.s32 %v33, 424
    %v599 = vadd.s32 %v33, 432
    %v600 = vadd.s32 %v33, 440
    %v601 = vadd.s32 %v33, 448
    %v602 = vadd.s32 %v33, 456
    %v603 = vadd.s32 %v33, 464
    %v604 = vadd.s32 %v33, 472
    %v605 = vadd.s32 %v33, 480
    %v606 = vadd.s32 %v33, 488
    %v607 = vadd.s32 %v33, 496
    %v608 = vadd.s32 %v33, 504
    %v609 = vadd.s32 %v33, 512
    %v610 = vadd.s32 %v33, 520
    %v611 = vadd.s32 %v33, 528
    %v612 = vadd.s32 %v33, 536
    %v613 = vadd.s32 %v33, 544
    %v614 = vadd.s32 %v33, 552
    %v615 = vadd.s32 %v33, 560
    %v616 = vadd.s32 %v33, 568
    %v617 = vadd.s32 %v33, 576
    %v618 = vadd.s32 %v33, 584
    %v619 = vadd.s32 %v33, 592
    %v620 = vadd.s32 %v33, 600
    %v621 = vadd.s32 %v33, 608
    %v622 = vadd.s32 %v33, 616
    %v623 = vadd.s32 %v33, 624
    %v624 = vadd.s32 %v33, 632
    %v625 = vadd.s32 %v33, 640
    %v626 = vadd.s32 %v33, 648
    %v627 = vadd.s32 %v33, 656
    %v628 = vadd.s32 %v33, 664
    %v629 = vadd.s32 %v33, 672
    %v630 = vadd.s32 %v33, 680
    %v631 = vadd.s32 %v33, 688
    %v632 = vadd.s32 %v33, 696
    %v633 = vadd.s32 %v33, 704
    %v634 = vadd.s32 %v33, 712
    %v635 = vadd.s32 %v33, 720
    %v636 = vadd.s32 %v33, 728
    %v637 = vadd.s32 %v33, 736
    %v638 = vadd.s32 %v33, 744
    %v639 = vadd.s32 %v33, 752
    %v640 = vadd.s32 %v33, 760
    %v641 = vadd.s32 %v33, 768
    %v642 = vadd.s32 %v33, 776
    %v643 = vadd.s32 %v33, 784
    %v644 = vadd.s32 %v33, 792
    %v645 = vadd.s32 %v33, 800
    %v646 = vadd.s32 %v33, 808
    %v647 = vadd.s32 %v33, 816
    %v648 = vadd.s32 %v33, 824
    %v649 = vadd.s32 %v33, 832
    %v650 = vadd.s32 %v33, 840
    %v651 = vadd.s32 %v33, 848
    %v652 = vadd.s32 %v33, 856
    %v653 = vadd.s32 %v33, 864
    %v654 = vadd.s32 %v33, 872
    %v655 = vadd.s32 %v33, 880
    %v656 = vadd.s32 %v33, 888
    %v657 = vadd.s32 %v33, 896
    %v658 = vadd.s32 %v33, 904
    %v659 = vadd.s32 %v33, 912
    %v660 = vadd.s32 %v33, 920
    %v661 = vadd.s32 %v33, 928
    %v662 = vadd.s32 %v33, 936
    %v663 = vadd.s32 %v33, 944
    %v664 = vadd.s32 %v33, 952
    %v665 = vadd.s32 %v33, 960
    %v666 = vadd.s32 %v33, 968
    %v667 = vadd.s32 %v33, 976
    %v668 = vadd.s32 %v33, 984
    %v669 = vadd.s32 %v33, 992
    %v670 = vadd.s32 %v33, 1000
    %v671 = vadd.s32 %v33, 1008
    %v672 = vadd.s32 %v33, 1016
    %vm673 = vcmp.lt.s32.totalorder %v33, 1000
    %vm674 = vcmp.lt.s32.totalorder %v546, 1000
    %vm675 = vcmp.lt.s32.totalorder %v547, 1000
    %vm676 = vcmp.lt.s32.totalorder %v548, 1000
    %vm677 = vcmp.lt.s32.totalorder %v549, 1000
    %vm678 = vcmp.lt.s32.totalorder %v550, 1000
    %vm679 = vcmp.lt.s32.totalorder %v551, 1000
    %vm680 = vcmp.lt.s32.totalorder %v552, 1000
    %vm681 = vcmp.lt.s32.totalorder %v553, 1000
    %vm682 = vcmp.lt.s32.totalorder %v554, 1000
    %vm683 = vcmp.lt.s32.totalorder %v555, 1000
    %vm684 = vcmp.lt.s32.totalorder %v556, 1000
    %vm685 = vcmp.lt.s32.totalorder %v557, 1000
    %vm686 = vcmp.lt.s32.totalorder %v558, 1000
    %vm687 = vcmp.lt.s32.totalorder %v559, 1000
    %vm688 = vcmp.lt.s32.totalorder %v560, 1000
    %vm689 = vcmp.lt.s32.totalorder %v561, 1000
    %vm690 = vcmp.lt.s32.totalorder %v562, 1000
    %vm691 = vcmp.lt.s32.totalorder %v563, 1000
    %vm692 = vcmp.lt.s32.totalorder %v564, 1000
    %vm693 = vcmp.lt.s32.totalorder %v565, 1000
    %vm694 = vcmp.lt.s32.totalorder %v566, 1000
    %vm695 = vcmp.lt.s32.totalorder %v567, 1000
    %vm696 = vcmp.lt.s32.totalorder %v568, 1000
    %vm697 = vcmp.lt.s32.totalorder %v569, 1000
    %vm698 = vcmp.lt.s32.totalorder %v570, 1000
    %vm699 = vcmp.lt.s32.totalorder %v571, 1000
    %vm700 = vcmp.lt.s32.totalorder %v572, 1000
    %vm701 = vcmp.lt.s32.totalorder %v573, 1000
    %vm702 = vcmp.lt.s32.totalorder %v574, 1000
    %vm703 = vcmp.lt.s32.totalorder %v575, 1000
    %vm704 = vcmp.lt.s32.totalorder %v576, 1000
    %vm705 = vcmp.lt.s32.totalorder %v577, 1000
    %vm706 = vcmp.lt.s32.totalorder %v578, 1000
    %vm707 = vcmp.lt.s32.totalorder %v579, 1000
    %vm708 = vcmp.lt.s32.totalorder %v580, 1000
    %vm709 = vcmp.lt.s32.totalorder %v581, 1000
    %vm710 = vcmp.lt.s32.totalorder %v582, 1000
    %vm711 = vcmp.lt.s32.totalorder %v583, 1000
    %vm712 = vcmp.lt.s32.totalorder %v584, 1000
    %vm713 = vcmp.lt.s32.totalorder %v585, 1000
    %vm714 = vcmp.lt.s32.totalorder %v586, 1000
    %vm715 = vcmp.lt.s32.totalorder %v587, 1000
    %vm716 = vcmp.lt.s32.totalorder %v588, 1000
    %vm717 = vcmp.lt.s32.totalorder %v589, 1000
    %vm718 = vcmp.lt.s32.totalorder %v590, 1000
    %vm719 = vcmp.lt.s32.totalorder %v591, 1000
    %vm720 = vcmp.lt.s32.totalorder %v592, 1000
    %vm721 = vcmp.lt.s32.totalorder %v593, 1000
    %vm722 = vcmp.lt.s32.totalorder %v594, 1000
    %vm723 = vcmp.lt.s32.totalorder %v595, 1000
    %vm724 = vcmp.lt.s32.totalorder %v596, 1000
    %vm725 = vcmp.lt.s32.totalorder %v597, 1000
    %vm726 = vcmp.lt.s32.totalorder %v598, 1000
    %vm727 = vcmp.lt.s32.totalorder %v599, 1000
    %vm728 = vcmp.lt.s32.totalorder %v600, 1000
    %vm729 = vcmp.lt.s32.totalorder %v601, 1000
    %vm730 = vcmp.lt.s32.totalorder %v602, 1000
    %vm731 = vcmp.lt.s32.totalorder %v603, 1000
    %vm732 = vcmp.lt.s32.totalorder %v604, 1000
    %vm733 = vcmp.lt.s32.totalorder %v605, 1000
    %vm734 = vcmp.lt.s32.totalorder %v606, 1000
    %vm735 = vcmp.lt.s32.totalorder %v607, 1000
    %vm736 = vcmp.lt.s32.totalorder %v608, 1000
    %vm737 = vcmp.lt.s32.totalorder %v609, 1000
    %vm738 = vcmp.lt.s32.totalorder %v610, 1000
    %vm739 = vcmp.lt.s32.totalorder %v611, 1000
    %vm740 = vcmp.lt.s32.totalorder %v612, 1000
    %vm741 = vcmp.lt.s32.totalorder %v613, 1000
    %vm742 = vcmp.lt.s32.totalorder %v614, 1000
    %vm743 = vcmp.lt.s32.totalorder %v615, 1000
    %vm744 = vcmp.lt.s32.totalorder %v616, 1000
    %vm745 = vcmp.lt.s32.totalorder %v617, 1000
    %vm746 = vcmp.lt.s32.totalorder %v618, 1000
    %vm747 = vcmp.lt.s32.totalorder %v619, 1000
    %vm748 = vcmp.lt.s32.totalorder %v620, 1000
    %vm749 = vcmp.lt.s32.totalorder %v621, 1000
    %vm750 = vcmp.lt.s32.totalorder %v622, 1000
    %vm751 = vcmp.lt.s32.totalorder %v623, 1000
    %vm752 = vcmp.lt.s32.totalorder %v624, 1000
    %vm753 = vcmp.lt.s32.totalorder %v625, 1000
    %vm754 = vcmp.lt.s32.totalorder %v626, 1000
    %vm755 = vcmp.lt.s32.totalorder %v627, 1000
    %vm756 = vcmp.lt.s32.totalorder %v628, 1000
    %vm757 = vcmp.lt.s32.totalorder %v629, 1000
    %vm758 = vcmp.lt.s32.totalorder %v630, 1000
    %vm759 = vcmp.lt.s32.totalorder %v631, 1000
    %vm760 = vcmp.lt.s32.totalorder %v632, 1000
    %vm761 = vcmp.lt.s32.totalorder %v633, 1000
    %vm762 = vcmp.lt.s32.totalorder %v634, 1000
    %vm763 = vcmp.lt.s32.totalorder %v635, 1000
    %vm764 = vcmp.lt.s32.totalorder %v636, 1000
    %vm765 = vcmp.lt.s32.totalorder %v637, 1000
    %vm766 = vcmp.lt.s32.totalorder %v638, 1000
    %vm767 = vcmp.lt.s32.totalorder %v639, 1000
    %vm768 = vcmp.lt.s32.totalorder %v640, 1000
    %vm769 = vcmp.lt.s32.totalorder %v641, 1000
    %vm770 = vcmp.lt.s32.totalorder %v642, 1000
    %vm771 = vcmp.lt.s32.totalorder %v643, 1000
    %vm772 = vcmp.lt.s32.totalorder %v644, 1000
    %vm773 = vcmp.lt.s32.totalorder %v645, 1000
    %vm774 = vcmp.lt.s32.totalorder %v646, 1000
    %vm775 = vcmp.lt.s32.totalorder %v647, 1000
    %vm776 = vcmp.lt.s32.totalorder %v648, 1000
    %vm777 = vcmp.lt.s32.totalorder %v649, 1000
    %vm778 = vcmp.lt.s32.totalorder %v650, 1000
    %vm779 = vcmp.lt.s32.totalorder %v651, 1000
    %vm780 = vcmp.lt.s32.totalorder %v652, 1000
    %vm781 = vcmp.lt.s32.totalorder %v653, 1000
    %vm782 = vcmp.lt.s32.totalorder %v654, 1000
    %vm783 = vcmp.lt.s32.totalorder %v655, 1000
    %vm784 = vcmp.lt.s32.totalorder %v656, 1000
    %vm785 = vcmp.lt.s32.totalorder %v657, 1000
    %vm786 = vcmp.lt.s32.totalorder %v658, 1000
    %vm787 = vcmp.lt.s32.totalorder %v659, 1000
    %vm788 = vcmp.lt.s32.totalorder %v660, 1000
    %vm789 = vcmp.lt.s32.totalorder %v661, 1000
    %vm790 = vcmp.lt.s32.totalorder %v662, 1000
    %vm791 = vcmp.lt.s32.totalorder %v663, 1000
    %vm792 = vcmp.lt.s32.totalorder %v664, 1000
    %vm793 = vcmp.lt.s32.totalorder %v665, 1000
    %vm794 = vcmp.lt.s32.totalorder %v666, 1000
    %vm795 = vcmp.lt.s32.totalorder %v667, 1000
    %vm796 = vcmp.lt.s32.totalorder %v668, 1000
    %vm797 = vcmp.lt.s32.totalorder %v669, 1000
    %vm798 = vcmp.lt.s32.totalorder %v670, 1000
    %vm799 = vcmp.lt.s32.totalorder %v671, 1000
    %vm800 = vcmp.lt.s32.totalorder %v672, 1000
    %v801 = vld [vmem:[%s1] sm:$0xff]
    %v802 = vld [vmem:[%s1 + $0x8] sm:$0xff]
    %v803 = vld [vmem:[%s1 + $0x10] sm:$0xff]
    %v804 = vld [vmem:[%s1 + $0x18] sm:$0xff]
    %v805 = vld [vmem:[%s1 + $0x20] sm:$0xff]
    %v806 = vld [vmem:[%s1 + $0x28] sm:$0xff]
    %v807 = vld [vmem:[%s1 + $0x30] sm:$0xff]
    %v808 = vld [vmem:[%s1 + $0x38] sm:$0xff]
    %v809 = vld [vmem:[%s1 + $0x40] sm:$0xff]
    %v810 = vld [vmem:[%s1 + $0x48] sm:$0xff]
    %v811 = vld [vmem:[%s1 + $0x50] sm:$0xff]
    %v812 = vld [vmem:[%s1 + $0x58] sm:$0xff]
    %v813 = vld [vmem:[%s1 + $0x60] sm:$0xff]
    %v814 = vld [vmem:[%s1 + $0x68] sm:$0xff]
    %v815 = vld [vmem:[%s1 + $0x70] sm:$0xff]
    %v816 = vld [vmem:[%s1 + $0x78] sm:$0xff]
    %v817 = vld [vmem:[%s1 + $0x80] sm:$0xff]
    %v818 = vld [vmem:[%s1 + $0x88] sm:$0xff]
    %v819 = vld [vmem:[%s1 + $0x90] sm:$0xff]
    %v820 = vld [vmem:[%s1 + $0x98] sm:$0xff]
    %v821 = vld [vmem:[%s1 + $0xa0] sm:$0xff]
    %v822 = vld [vmem:[%s1 + $0xa8] sm:$0xff]
    %v823 = vld [vmem:[%s1 + $0xb0] sm:$0xff]
    %v824 = vld [vmem:[%s1 + $0xb8] sm:$0xff]
    %v825 = vld [vmem:[%s1 + $0xc0] sm:$0xff]
    %v826 = vld [vmem:[%s1 + $0xc8] sm:$0xff]
    %v827 = vld [vmem:[%s1 + $0xd0] sm:$0xff]
    %v828 = vld [vmem:[%s1 + $0xd8] sm:$0xff]
    %v829 = vld [vmem:[%s1 + $0xe0] sm:$0xff]
    %v830 = vld [vmem:[%s1 + $0xe8] sm:$0xff]
    %v831 = vld [vmem:[%s1 + $0xf0] sm:$0xff]
    %v832 = vld [vmem:[%s1 + $0xf8] sm:$0xff]
    %v833 = vld [vmem:[%s1 + $0x100] sm:$0xff]
    %v834 = vld [vmem:[%s1 + $0x108] sm:$0xff]
    %v835 = vld [vmem:[%s1 + $0x110] sm:$0xff]
    %v836 = vld [vmem:[%s1 + $0x118] sm:$0xff]
    %v837 = vld [vmem:[%s1 + $0x120] sm:$0xff]
    %v838 = vld [vmem:[%s1 + $0x128] sm:$0xff]
    %v839 = vld [vmem:[%s1 + $0x130] sm:$0xff]
    %v840 = vld [vmem:[%s1 + $0x138] sm:$0xff]
    %v841 = vld [vmem:[%s1 + $0x140] sm:$0xff]
    %v842 = vld [vmem:[%s1 + $0x148] sm:$0xff]
    %v843 = vld [vmem:[%s1 + $0x150] sm:$0xff]
    %v844 = vld [vmem:[%s1 + $0x158] sm:$0xff]
    %v845 = vld [vmem:[%s1 + $0x160] sm:$0xff]
    %v846 = vld [vmem:[%s1 + $0x168] sm:$0xff]
    %v847 = vld [vmem:[%s1 + $0x170] sm:$0xff]
    %v848 = vld [vmem:[%s1 + $0x178] sm:$0xff]
    %v849 = vld [vmem:[%s1 + $0x180] sm:$0xff]
    %v850 = vld [vmem:[%s1 + $0x188] sm:$0xff]
    %v851 = vld [vmem:[%s1 + $0x190] sm:$0xff]
    %v852 = vld [vmem:[%s1 + $0x198] sm:$0xff]
    %v853 = vld [vmem:[%s1 + $0x1a0] sm:$0xff]
    %v854 = vld [vmem:[%s1 + $0x1a8] sm:$0xff]
    %v855 = vld [vmem:[%s1 + $0x1b0] sm:$0xff]
    %v856 = vld [vmem:[%s1 + $0x1b8] sm:$0xff]
    %v857 = vld [vmem:[%s1 + $0x1c0] sm:$0xff]
    %v858 = vld [vmem:[%s1 + $0x1c8] sm:$0xff]
    %v859 = vld [vmem:[%s1 + $0x1d0] sm:$0xff]
    %v860 = vld [vmem:[%s1 + $0x1d8] sm:$0xff]
    %v861 = vld [vmem:[%s1 + $0x1e0] sm:$0xff]
    %v862 = vld [vmem:[%s1 + $0x1e8] sm:$0xff]
    %v863 = vld [vmem:[%s1 + $0x1f0] sm:$0xff]
    %v864 = vld [vmem:[%s1 + $0x1f8] sm:$0xff]
    %v865 = vld [vmem:[%s1 + $0x200] sm:$0xff]
    %v866 = vld [vmem:[%s1 + $0x208] sm:$0xff]
    %v867 = vld [vmem:[%s1 + $0x210] sm:$0xff]
    %v868 = vld [vmem:[%s1 + $0x218] sm:$0xff]
    %v869 = vld [vmem:[%s1 + $0x220] sm:$0xff]
    %v870 = vld [vmem:[%s1 + $0x228] sm:$0xff]
    %v871 = vld [vmem:[%s1 + $0x230] sm:$0xff]
    %v872 = vld [vmem:[%s1 + $0x238] sm:$0xff]
    %v873 = vld [vmem:[%s1 + $0x240] sm:$0xff]
    %v874 = vld [vmem:[%s1 + $0x248] sm:$0xff]
    %v875 = vld [vmem:[%s1 + $0x250] sm:$0xff]
    %v876 = vld [vmem:[%s1 + $0x258] sm:$0xff]
    %v877 = vld [vmem:[%s1 + $0x260] sm:$0xff]
    %v878 = vld [vmem:[%s1 + $0x268] sm:$0xff]
    %v879 = vld [vmem:[%s1 + $0x270] sm:$0xff]
    %v880 = vld [vmem:[%s1 + $0x278] sm:$0xff]
    %v881 = vld [vmem:[%s1 + $0x280] sm:$0xff]
    %v882 = vld [vmem:[%s1 + $0x288] sm:$0xff]
    %v883 = vld [vmem:[%s1 + $0x290] sm:$0xff]
    %v884 = vld [vmem:[%s1 + $0x298] sm:$0xff]
    %v885 = vld [vmem:[%s1 + $0x2a0] sm:$0xff]
    %v886 = vld [vmem:[%s1 + $0x2a8] sm:$0xff]
    %v887 = vld [vmem:[%s1 + $0x2b0] sm:$0xff]
    %v888 = vld [vmem:[%s1 + $0x2b8] sm:$0xff]
    %v889 = vld [vmem:[%s1 + $0x2c0] sm:$0xff]
    %v890 = vld [vmem:[%s1 + $0x2c8] sm:$0xff]
    %v891 = vld [vmem:[%s1 + $0x2d0] sm:$0xff]
    %v892 = vld [vmem:[%s1 + $0x2d8] sm:$0xff]
    %v893 = vld [vmem:[%s1 + $0x2e0] sm:$0xff]
    %v894 = vld [vmem:[%s1 + $0x2e8] sm:$0xff]
    %v895 = vld [vmem:[%s1 + $0x2f0] sm:$0xff]
    %v896 = vld [vmem:[%s1 + $0x2f8] sm:$0xff]
    %v897 = vld [vmem:[%s1 + $0x300] sm:$0xff]
    %v898 = vld [vmem:[%s1 + $0x308] sm:$0xff]
    %v899 = vld [vmem:[%s1 + $0x310] sm:$0xff]
    %v900 = vld [vmem:[%s1 + $0x318] sm:$0xff]
    %v901 = vld [vmem:[%s1 + $0x320] sm:$0xff]
    %v902 = vld [vmem:[%s1 + $0x328] sm:$0xff]
    %v903 = vld [vmem:[%s1 + $0x330] sm:$0xff]
    %v904 = vld [vmem:[%s1 + $0x338] sm:$0xff]
    %v905 = vld [vmem:[%s1 + $0x340] sm:$0xff]
    %v906 = vld [vmem:[%s1 + $0x348] sm:$0xff]
    %v907 = vld [vmem:[%s1 + $0x350] sm:$0xff]
    %v908 = vld [vmem:[%s1 + $0x358] sm:$0xff]
    %v909 = vld [vmem:[%s1 + $0x360] sm:$0xff]
    %v910 = vld [vmem:[%s1 + $0x368] sm:$0xff]
    %v911 = vld [vmem:[%s1 + $0x370] sm:$0xff]
    %v912 = vld [vmem:[%s1 + $0x378] sm:$0xff]
    %v913 = vld [vmem:[%s1 + $0x380] sm:$0xff]
    %v914 = vld [vmem:[%s1 + $0x388] sm:$0xff]
    %v915 = vld [vmem:[%s1 + $0x390] sm:$0xff]
    %v916 = vld [vmem:[%s1 + $0x398] sm:$0xff]
    %v917 = vld [vmem:[%s1 + $0x3a0] sm:$0xff]
    %v918 = vld [vmem:[%s1 + $0x3a8] sm:$0xff]
    %v919 = vld [vmem:[%s1 + $0x3b0] sm:$0xff]
    %v920 = vld [vmem:[%s1 + $0x3b8] sm:$0xff]
    %v921 = vld [vmem:[%s1 + $0x3c0] sm:$0xff]
    %v922 = vld [vmem:[%s1 + $0x3c8] sm:$0xff]
    %v923 = vld [vmem:[%s1 + $0x3d0] sm:$0xff]
    %v924 = vld [vmem:[%s1 + $0x3d8] sm:$0xff]
    %v925 = vld [vmem:[%s1 + $0x3e0] sm:$0xff]
    %v926 = vld [vmem:[%s1 + $0x3e8] sm:$0xff]
    %v927 = vld [vmem:[%s1 + $0x3f0] sm:$0xff]
    %v928 = vld [vmem:[%s1 + $0x3f8] sm:$0xff]
    %v929 = vsel %vm673, 1, 0
    %v930 = vsel %vm674, 1, 0
    %v931 = vsel %vm675, 1, 0
    %v932 = vsel %vm676, 1, 0
    %v933 = vsel %vm677, 1, 0
    %v934 = vsel %vm678, 1, 0
    %v935 = vsel %vm679, 1, 0
    %v936 = vsel %vm680, 1, 0
    %v937 = vsel %vm681, 1, 0
    %v938 = vsel %vm682, 1, 0
    %v939 = vsel %vm683, 1, 0
    %v940 = vsel %vm684, 1, 0
    %v941 = vsel %vm685, 1, 0
    %v942 = vsel %vm686, 1, 0
    %v943 = vsel %vm687, 1, 0
    %v944 = vsel %vm688, 1, 0
    %v945 = vsel %vm689, 1, 0
    %v946 = vsel %vm690, 1, 0
    %v947 = vsel %vm691, 1, 0
    %v948 = vsel %vm692, 1, 0
    %v949 = vsel %vm693, 1, 0
    %v950 = vsel %vm694, 1, 0
    %v951 = vsel %vm695, 1, 0
    %v952 = vsel %vm696, 1, 0
    %v953 = vsel %vm697, 1, 0
    %v954 = vsel %vm698, 1, 0
    %v955 = vsel %vm699, 1, 0
    %v956 = vsel %vm700, 1, 0
    %v957 = vsel %vm701, 1, 0
    %v958 = vsel %vm702, 1, 0
    %v959 = vsel %vm703, 1, 0
    %v960 = vsel %vm704, 1, 0
    %v961 = vsel %vm705, 1, 0
    %v962 = vsel %vm706, 1, 0
    %v963 = vsel %vm707, 1, 0
    %v964 = vsel %vm708, 1, 0
    %v965 = vsel %vm709, 1, 0
    %v966 = vsel %vm710, 1, 0
    %v967 = vsel %vm711, 1, 0
    %v968 = vsel %vm712, 1, 0
    %v969 = vsel %vm713, 1, 0
    %v970 = vsel %vm714, 1, 0
    %v971 = vsel %vm715, 1, 0
    %v972 = vsel %vm716, 1, 0
    %v973 = vsel %vm717, 1, 0
    %v974 = vsel %vm718, 1, 0
    %v975 = vsel %vm719, 1, 0
    %v976 = vsel %vm720, 1, 0
    %v977 = vsel %vm721, 1, 0
    %v978 = vsel %vm722, 1, 0
    %v979 = vsel %vm723, 1, 0
    %v980 = vsel %vm724, 1, 0
    %v981 = vsel %vm725, 1, 0
    %v982 = vsel %vm726, 1, 0
    %v983 = vsel %vm727, 1, 0
    %v984 = vsel %vm728, 1, 0
    %v985 = vsel %vm729, 1, 0
    %v986 = vsel %vm730, 1, 0
    %v987 = vsel %vm731, 1, 0
    %v988 = vsel %vm732, 1, 0
    %v989 = vsel %vm733, 1, 0
    %v990 = vsel %vm734, 1, 0
    %v991 = vsel %vm735, 1, 0
    %v992 = vsel %vm736, 1, 0
    %v993 = vsel %vm737, 1, 0
    %v994 = vsel %vm738, 1, 0
    %v995 = vsel %vm739, 1, 0
    %v996 = vsel %vm740, 1, 0
    %v997 = vsel %vm741, 1, 0
    %v998 = vsel %vm742, 1, 0
    %v999 = vsel %vm743, 1, 0
    %v1000 = vsel %vm744, 1, 0
    %v1001 = vsel %vm745, 1, 0
    %v1002 = vsel %vm746, 1, 0
    %v1003 = vsel %vm747, 1, 0
    %v1004 = vsel %vm748, 1, 0
    %v1005 = vsel %vm749, 1, 0
    %v1006 = vsel %vm750, 1, 0
    %v1007 = vsel %vm751, 1, 0
    %v1008 = vsel %vm752, 1, 0
    %v1009 = vsel %vm753, 1, 0
    %v1010 = vsel %vm754, 1, 0
    %v1011 = vsel %vm755, 1, 0
    %v1012 = vsel %vm756, 1, 0
    %v1013 = vsel %vm757, 1, 0
    %v1014 = vsel %vm758, 1, 0
    %v1015 = vsel %vm759, 1, 0
    %v1016 = vsel %vm760, 1, 0
    %v1017 = vsel %vm761, 1, 0
    %v1018 = vsel %vm762, 1, 0
    %v1019 = vsel %vm763, 1, 0
    %v1020 = vsel %vm764, 1, 0
    %v1021 = vsel %vm765, 1, 0
    %v1022 = vsel %vm766, 1, 0
    %v1023 = vsel %vm767, 1, 0
    %v1024 = vsel %vm768, 1, 0
    %v1025 = vsel %vm769, 1, 0
    %v1026 = vsel %vm770, 1, 0
    %v1027 = vsel %vm771, 1, 0
    %v1028 = vsel %vm772, 1, 0
    %v1029 = vsel %vm773, 1, 0
    %v1030 = vsel %vm774, 1, 0
    %v1031 = vsel %vm775, 1, 0
    %v1032 = vsel %vm776, 1, 0
    %v1033 = vsel %vm777, 1, 0
    %v1034 = vsel %vm778, 1, 0
    %v1035 = vsel %vm779, 1, 0
    %v1036 = vsel %vm780, 1, 0
    %v1037 = vsel %vm781, 1, 0
    %v1038 = vsel %vm782, 1, 0
    %v1039 = vsel %vm783, 1, 0
    %v1040 = vsel %vm784, 1, 0
    %v1041 = vsel %vm785, 1, 0
    %v1042 = vsel %vm786, 1, 0
    %v1043 = vsel %vm787, 1, 0
    %v1044 = vsel %vm788, 1, 0
    %v1045 = vsel %vm789, 1, 0
    %v1046 = vsel %vm790, 1, 0
    %v1047 = vsel %vm791, 1, 0
    %v1048 = vsel %vm792, 1, 0
    %v1049 = vsel %vm793, 1, 0
    %v1050 = vsel %vm794, 1, 0
    %v1051 = vsel %vm795, 1, 0
    %v1052 = vsel %vm796, 1, 0
    %v1053 = vsel %vm797, 1, 0
    %v1054 = vsel %vm798, 1, 0
    %v1055 = vsel %vm799, 1, 0
    %v1056 = vsel %vm800, 1, 0
    %vm1057 = vcmp.eq.s32.totalorder %v929, 1
    %vm1058 = vcmp.eq.s32.totalorder %v930, 1
    %vm1059 = vcmp.eq.s32.totalorder %v931, 1
    %vm1060 = vcmp.eq.s32.totalorder %v932, 1
    %vm1061 = vcmp.eq.s32.totalorder %v933, 1
    %vm1062 = vcmp.eq.s32.totalorder %v934, 1
    %vm1063 = vcmp.eq.s32.totalorder %v935, 1
    %vm1064 = vcmp.eq.s32.totalorder %v936, 1
    %vm1065 = vcmp.eq.s32.totalorder %v937, 1
    %vm1066 = vcmp.eq.s32.totalorder %v938, 1
    %vm1067 = vcmp.eq.s32.totalorder %v939, 1
    %vm1068 = vcmp.eq.s32.totalorder %v940, 1
    %vm1069 = vcmp.eq.s32.totalorder %v941, 1
    %vm1070 = vcmp.eq.s32.totalorder %v942, 1
    %vm1071 = vcmp.eq.s32.totalorder %v943, 1
    %vm1072 = vcmp.eq.s32.totalorder %v944, 1
    %vm1073 = vcmp.eq.s32.totalorder %v945, 1
    %vm1074 = vcmp.eq.s32.totalorder %v946, 1
    %vm1075 = vcmp.eq.s32.totalorder %v947, 1
    %vm1076 = vcmp.eq.s32.totalorder %v948, 1
    %vm1077 = vcmp.eq.s32.totalorder %v949, 1
    %vm1078 = vcmp.eq.s32.totalorder %v950, 1
    %vm1079 = vcmp.eq.s32.totalorder %v951, 1
    %vm1080 = vcmp.eq.s32.totalorder %v952, 1
    %vm1081 = vcmp.eq.s32.totalorder %v953, 1
    %vm1082 = vcmp.eq.s32.totalorder %v954, 1
    %vm1083 = vcmp.eq.s32.totalorder %v955, 1
    %vm1084 = vcmp.eq.s32.totalorder %v956, 1
    %vm1085 = vcmp.eq.s32.totalorder %v957, 1
    %vm1086 = vcmp.eq.s32.totalorder %v958, 1
    %vm1087 = vcmp.eq.s32.totalorder %v959, 1
    %vm1088 = vcmp.eq.s32.totalorder %v960, 1
    %vm1089 = vcmp.eq.s32.totalorder %v961, 1
    %vm1090 = vcmp.eq.s32.totalorder %v962, 1
    %vm1091 = vcmp.eq.s32.totalorder %v963, 1
    %vm1092 = vcmp.eq.s32.totalorder %v964, 1
    %vm1093 = vcmp.eq.s32.totalorder %v965, 1
    %vm1094 = vcmp.eq.s32.totalorder %v966, 1
    %vm1095 = vcmp.eq.s32.totalorder %v967, 1
    %vm1096 = vcmp.eq.s32.totalorder %v968, 1
    %vm1097 = vcmp.eq.s32.totalorder %v969, 1
    %vm1098 = vcmp.eq.s32.totalorder %v970, 1
    %vm1099 = vcmp.eq.s32.totalorder %v971, 1
    %vm1100 = vcmp.eq.s32.totalorder %v972, 1
    %vm1101 = vcmp.eq.s32.totalorder %v973, 1
    %vm1102 = vcmp.eq.s32.totalorder %v974, 1
    %vm1103 = vcmp.eq.s32.totalorder %v975, 1
    %vm1104 = vcmp.eq.s32.totalorder %v976, 1
    %vm1105 = vcmp.eq.s32.totalorder %v977, 1
    %vm1106 = vcmp.eq.s32.totalorder %v978, 1
    %vm1107 = vcmp.eq.s32.totalorder %v979, 1
    %vm1108 = vcmp.eq.s32.totalorder %v980, 1
    %vm1109 = vcmp.eq.s32.totalorder %v981, 1
    %vm1110 = vcmp.eq.s32.totalorder %v982, 1
    %vm1111 = vcmp.eq.s32.totalorder %v983, 1
    %vm1112 = vcmp.eq.s32.totalorder %v984, 1
    %vm1113 = vcmp.eq.s32.totalorder %v985, 1
    %vm1114 = vcmp.eq.s32.totalorder %v986, 1
    %vm1115 = vcmp.eq.s32.totalorder %v987, 1
    %vm1116 = vcmp.eq.s32.totalorder %v988, 1
    %vm1117 = vcmp.eq.s32.totalorder %v989, 1
    %vm1118 = vcmp.eq.s32.totalorder %v990, 1
    %vm1119 = vcmp.eq.s32.totalorder %v991, 1
    %vm1120 = vcmp.eq.s32.totalorder %v992, 1
    %vm1121 = vcmp.eq.s32.totalorder %v993, 1
    %vm1122 = vcmp.eq.s32.totalorder %v994, 1
    %vm1123 = vcmp.eq.s32.totalorder %v995, 1
    %vm1124 = vcmp.eq.s32.totalorder %v996, 1
    %vm1125 = vcmp.eq.s32.totalorder %v997, 1
    %vm1126 = vcmp.eq.s32.totalorder %v998, 1
    %vm1127 = vcmp.eq.s32.totalorder %v999, 1
    %vm1128 = vcmp.eq.s32.totalorder %v1000, 1
    %vm1129 = vcmp.eq.s32.totalorder %v1001, 1
    %vm1130 = vcmp.eq.s32.totalorder %v1002, 1
    %vm1131 = vcmp.eq.s32.totalorder %v1003, 1
    %vm1132 = vcmp.eq.s32.totalorder %v1004, 1
    %vm1133 = vcmp.eq.s32.totalorder %v1005, 1
    %vm1134 = vcmp.eq.s32.totalorder %v1006, 1
    %vm1135 = vcmp.eq.s32.totalorder %v1007, 1
    %vm1136 = vcmp.eq.s32.totalorder %v1008, 1
    %vm1137 = vcmp.eq.s32.totalorder %v1009, 1
    %vm1138 = vcmp.eq.s32.totalorder %v1010, 1
    %vm1139 = vcmp.eq.s32.totalorder %v1011, 1
    %vm1140 = vcmp.eq.s32.totalorder %v1012, 1
    %vm1141 = vcmp.eq.s32.totalorder %v1013, 1
    %vm1142 = vcmp.eq.s32.totalorder %v1014, 1
    %vm1143 = vcmp.eq.s32.totalorder %v1015, 1
    %vm1144 = vcmp.eq.s32.totalorder %v1016, 1
    %vm1145 = vcmp.eq.s32.totalorder %v1017, 1
    %vm1146 = vcmp.eq.s32.totalorder %v1018, 1
    %vm1147 = vcmp.eq.s32.totalorder %v1019, 1
    %vm1148 = vcmp.eq.s32.totalorder %v1020, 1
    %vm1149 = vcmp.eq.s32.totalorder %v1021, 1
    %vm1150 = vcmp.eq.s32.totalorder %v1022, 1
    %vm1151 = vcmp.eq.s32.totalorder %v1023, 1
    %vm1152 = vcmp.eq.s32.totalorder %v1024, 1
    %vm1153 = vcmp.eq.s32.totalorder %v1025, 1
    %vm1154 = vcmp.eq.s32.totalorder %v1026, 1
    %vm1155 = vcmp.eq.s32.totalorder %v1027, 1
    %vm1156 = vcmp.eq.s32.totalorder %v1028, 1
    %vm1157 = vcmp.eq.s32.totalorder %v1029, 1
    %vm1158 = vcmp.eq.s32.totalorder %v1030, 1
    %vm1159 = vcmp.eq.s32.totalorder %v1031, 1
    %vm1160 = vcmp.eq.s32.totalorder %v1032, 1
    %vm1161 = vcmp.eq.s32.totalorder %v1033, 1
    %vm1162 = vcmp.eq.s32.totalorder %v1034, 1
    %vm1163 = vcmp.eq.s32.totalorder %v1035, 1
    %vm1164 = vcmp.eq.s32.totalorder %v1036, 1
    %vm1165 = vcmp.eq.s32.totalorder %v1037, 1
    %vm1166 = vcmp.eq.s32.totalorder %v1038, 1
    %vm1167 = vcmp.eq.s32.totalorder %v1039, 1
    %vm1168 = vcmp.eq.s32.totalorder %v1040, 1
    %vm1169 = vcmp.eq.s32.totalorder %v1041, 1
    %vm1170 = vcmp.eq.s32.totalorder %v1042, 1
    %vm1171 = vcmp.eq.s32.totalorder %v1043, 1
    %vm1172 = vcmp.eq.s32.totalorder %v1044, 1
    %vm1173 = vcmp.eq.s32.totalorder %v1045, 1
    %vm1174 = vcmp.eq.s32.totalorder %v1046, 1
    %vm1175 = vcmp.eq.s32.totalorder %v1047, 1
    %vm1176 = vcmp.eq.s32.totalorder %v1048, 1
    %vm1177 = vcmp.eq.s32.totalorder %v1049, 1
    %vm1178 = vcmp.eq.s32.totalorder %v1050, 1
    %vm1179 = vcmp.eq.s32.totalorder %v1051, 1
    %vm1180 = vcmp.eq.s32.totalorder %v1052, 1
    %vm1181 = vcmp.eq.s32.totalorder %v1053, 1
    %vm1182 = vcmp.eq.s32.totalorder %v1054, 1
    %vm1183 = vcmp.eq.s32.totalorder %v1055, 1
    %vm1184 = vcmp.eq.s32.totalorder %v1056, 1
    %v1185 = vsel %vm1057, %v801, 0.0
    %v1186 = vsel %vm1058, %v802, 0.0
    %v1187 = vsel %vm1059, %v803, 0.0
    %v1188 = vsel %vm1060, %v804, 0.0
    %v1189 = vsel %vm1061, %v805, 0.0
    %v1190 = vsel %vm1062, %v806, 0.0
    %v1191 = vsel %vm1063, %v807, 0.0
    %v1192 = vsel %vm1064, %v808, 0.0
    %v1193 = vsel %vm1065, %v809, 0.0
    %v1194 = vsel %vm1066, %v810, 0.0
    %v1195 = vsel %vm1067, %v811, 0.0
    %v1196 = vsel %vm1068, %v812, 0.0
    %v1197 = vsel %vm1069, %v813, 0.0
    %v1198 = vsel %vm1070, %v814, 0.0
    %v1199 = vsel %vm1071, %v815, 0.0
    %v1200 = vsel %vm1072, %v816, 0.0
    %v1201 = vsel %vm1073, %v817, 0.0
    %v1202 = vsel %vm1074, %v818, 0.0
    %v1203 = vsel %vm1075, %v819, 0.0
    %v1204 = vsel %vm1076, %v820, 0.0
    %v1205 = vsel %vm1077, %v821, 0.0
    %v1206 = vsel %vm1078, %v822, 0.0
    %v1207 = vsel %vm1079, %v823, 0.0
    %v1208 = vsel %vm1080, %v824, 0.0
    %v1209 = vsel %vm1081, %v825, 0.0
    %v1210 = vsel %vm1082, %v826, 0.0
    %v1211 = vsel %vm1083, %v827, 0.0
    %v1212 = vsel %vm1084, %v828, 0.0
    %v1213 = vsel %vm1085, %v829, 0.0
    %v1214 = vsel %vm1086, %v830, 0.0
    %v1215 = vsel %vm1087, %v831, 0.0
    %v1216 = vsel %vm1088, %v832, 0.0
    %v1217 = vsel %vm1089, %v833, 0.0
    %v1218 = vsel %vm1090, %v834, 0.0
    %v1219 = vsel %vm1091, %v835, 0.0
    %v1220 = vsel %vm1092, %v836, 0.0
    %v1221 = vsel %vm1093, %v837, 0.0
    %v1222 = vsel %vm1094, %v838, 0.0
    %v1223 = vsel %vm1095, %v839, 0.0
    %v1224 = vsel %vm1096, %v840, 0.0
    %v1225 = vsel %vm1097, %v841, 0.0
    %v1226 = vsel %vm1098, %v842, 0.0
    %v1227 = vsel %vm1099, %v843, 0.0
    %v1228 = vsel %vm1100, %v844, 0.0
    %v1229 = vsel %vm1101, %v845, 0.0
    %v1230 = vsel %vm1102, %v846, 0.0
    %v1231 = vsel %vm1103, %v847, 0.0
    %v1232 = vsel %vm1104, %v848, 0.0
    %v1233 = vsel %vm1105, %v849, 0.0
    %v1234 = vsel %vm1106, %v850, 0.0
    %v1235 = vsel %vm1107, %v851, 0.0
    %v1236 = vsel %vm1108, %v852, 0.0
    %v1237 = vsel %vm1109, %v853, 0.0
    %v1238 = vsel %vm1110, %v854, 0.0
    %v1239 = vsel %vm1111, %v855, 0.0
    %v1240 = vsel %vm1112, %v856, 0.0
    %v1241 = vsel %vm1113, %v857, 0.0
    %v1242 = vsel %vm1114, %v858, 0.0
    %v1243 = vsel %vm1115, %v859, 0.0
    %v1244 = vsel %vm1116, %v860, 0.0
    %v1245 = vsel %vm1117, %v861, 0.0
    %v1246 = vsel %vm1118, %v862, 0.0
    %v1247 = vsel %vm1119, %v863, 0.0
    %v1248 = vsel %vm1120, %v864, 0.0
    %v1249 = vsel %vm1121, %v865, 0.0
    %v1250 = vsel %vm1122, %v866, 0.0
    %v1251 = vsel %vm1123, %v867, 0.0
    %v1252 = vsel %vm1124, %v868, 0.0
    %v1253 = vsel %vm1125, %v869, 0.0
    %v1254 = vsel %vm1126, %v870, 0.0
    %v1255 = vsel %vm1127, %v871, 0.0
    %v1256 = vsel %vm1128, %v872, 0.0
    %v1257 = vsel %vm1129, %v873, 0.0
    %v1258 = vsel %vm1130, %v874, 0.0
    %v1259 = vsel %vm1131, %v875, 0.0
    %v1260 = vsel %vm1132, %v876, 0.0
    %v1261 = vsel %vm1133, %v877, 0.0
    %v1262 = vsel %vm1134, %v878, 0.0
    %v1263 = vsel %vm1135, %v879, 0.0
    %v1264 = vsel %vm1136, %v880, 0.0
    %v1265 = vsel %vm1137, %v881, 0.0
    %v1266 = vsel %vm1138, %v882, 0.0
    %v1267 = vsel %vm1139, %v883, 0.0
    %v1268 = vsel %vm1140, %v884, 0.0
    %v1269 = vsel %vm1141, %v885, 0.0
    %v1270 = vsel %vm1142, %v886, 0.0
    %v1271 = vsel %vm1143, %v887, 0.0
    %v1272 = vsel %vm1144, %v888, 0.0
    %v1273 = vsel %vm1145, %v889, 0.0
    %v1274 = vsel %vm1146, %v890, 0.0
    %v1275 = vsel %vm1147, %v891, 0.0
    %v1276 = vsel %vm1148, %v892, 0.0
    %v1277 = vsel %vm1149, %v893, 0.0
    %v1278 = vsel %vm1150, %v894, 0.0
    %v1279 = vsel %vm1151, %v895, 0.0
    %v1280 = vsel %vm1152, %v896, 0.0
    %v1281 = vsel %vm1153, %v897, 0.0
    %v1282 = vsel %vm1154, %v898, 0.0
    %v1283 = vsel %vm1155, %v899, 0.0
    %v1284 = vsel %vm1156, %v900, 0.0
    %v1285 = vsel %vm1157, %v901, 0.0
    %v1286 = vsel %vm1158, %v902, 0.0
    %v1287 = vsel %vm1159, %v903, 0.0
    %v1288 = vsel %vm1160, %v904, 0.0
    %v1289 = vsel %vm1161, %v905, 0.0
    %v1290 = vsel %vm1162, %v906, 0.0
    %v1291 = vsel %vm1163, %v907, 0.0
    %v1292 = vsel %vm1164, %v908, 0.0
    %v1293 = vsel %vm1165, %v909, 0.0
    %v1294 = vsel %vm1166, %v910, 0.0
    %v1295 = vsel %vm1167, %v911, 0.0
    %v1296 = vsel %vm1168, %v912, 0.0
    %v1297 = vsel %vm1169, %v913, 0.0
    %v1298 = vsel %vm1170, %v914, 0.0
    %v1299 = vsel %vm1171, %v915, 0.0
    %v1300 = vsel %vm1172, %v916, 0.0
    %v1301 = vsel %vm1173, %v917, 0.0
    %v1302 = vsel %vm1174, %v918, 0.0
    %v1303 = vsel %vm1175, %v919, 0.0
    %v1304 = vsel %vm1176, %v920, 0.0
    %v1305 = vsel %vm1177, %v921, 0.0
    %v1306 = vsel %vm1178, %v922, 0.0
    %v1307 = vsel %vm1179, %v923, 0.0
    %v1308 = vsel %vm1180, %v924, 0.0
    %v1309 = vsel %vm1181, %v925, 0.0
    %v1310 = vsel %vm1182, %v926, 0.0
    %v1311 = vsel %vm1183, %v927, 0.0
    %v1312 = vsel %vm1184, %v928, 0.0
    %v1313 = vsel %vm538, 1, 0
    %v1314 = vsel %vm539, 1, 0
    %v1315 = vsel %vm540, 1, 0
    %v1316 = vsel %vm541, 1, 0
    %v1317 = vsel %vm542, 1, 0
    %v1318 = vsel %vm543, 1, 0
    %v1319 = vsel %vm544, 1, 0
    %v1320 = vsel %vm545, 1, 0
    %vm1321 = vcmp.eq.s32.totalorder %v1313, 1
    %vm1322 = vcmp.eq.s32.totalorder %v1314, 1
    %vm1323 = vcmp.eq.s32.totalorder %v1315, 1
    %vm1324 = vcmp.eq.s32.totalorder %v1316, 1
    %vm1325 = vcmp.eq.s32.totalorder %v1317, 1
    %vm1326 = vcmp.eq.s32.totalorder %v1318, 1
    %vm1327 = vcmp.eq.s32.totalorder %v1319, 1
    %vm1328 = vcmp.eq.s32.totalorder %v1320, 1
    %vm1329 = vmand %vm42, %vm1321
    %vm1330 = vmand %vm43, %vm1322
    %vm1331 = vmand %vm44, %vm1323
    %vm1332 = vmand %vm45, %vm1324
    %vm1333 = vmand %vm46, %vm1325
    %vm1334 = vmand %vm47, %vm1326
    %vm1335 = vmand %vm48, %vm1327
    %vm1336 = vmand %vm49, %vm1328
    %v1337 = vsel %vm1329, 1, 0
    %v1338 = vsel %vm1330, 1, 0
    %v1339 = vsel %vm1331, 1, 0
    %v1340 = vsel %vm1332, 1, 0
    %v1341 = vsel %vm1333, 1, 0
    %v1342 = vsel %vm1334, 1, 0
    %v1343 = vsel %vm1335, 1, 0
    %v1344 = vsel %vm1336, 1, 0
    %v1345 = vcvt.s32.f32 %v1337
    %v1346 = vcvt.s32.f32 %v1338
    %v1347 = vcvt.s32.f32 %v1339
    %v1348 = vcvt.s32.f32 %v1340
    %v1349 = vcvt.s32.f32 %v1341
    %v1350 = vcvt.s32.f32 %v1342
    %v1351 = vcvt.s32.f32 %v1343
    %v1352 = vcvt.s32.f32 %v1344
    %v1353 = vld [vmem:[#allocation2] sm:$0xff]
    %1354 = vmatpush.msra.mxu0 %v1200
    %1355 = vmatpush.msra.mxu0 %v1199
    %1356 = vmatpush.msra.mxu0 %v1198
    %1357 = vmatpush.msra.mxu0 %v1197
    %1358 = vmatpush.msra.mxu0 %v1196
    %1359 = vmatpush.msra.mxu0 %v1195
    %1360 = vmatpush.msra.mxu0 %v1194
    %1361 = vmatpush.msra.mxu0 %v1193
    %1362 = vmatpush.msra.mxu0 %v1192
    %1363 = vmatpush.msra.mxu0 %v1191
    %1364 = vmatpush.msra.mxu0 %v1190
    %1365 = vmatpush.msra.mxu0 %v1189
    %1366 = vmatpush.msra.mxu0 %v1188
    %1367 = vmatpush.msra.mxu0 %v1187
    %1368 = vmatpush.msra.mxu0 %v1186
    %1369 = vmatpush.msra.mxu0 %v1185
    %1370 = vmatmul.f32.gmra.mxu0 %v1345
    %v1371 = vpop.f32.mrf.mxu0
    %v1372 = vadd.f32 0.0, %v1371
    %1373 = vdwg.mxu0
    %1374 = vmatpush.msra.mxu0 %v1216
    %1375 = vmatpush.msra.mxu0 %v1215
    %1376 = vmatpush.msra.mxu0 %v1214
    %1377 = vmatpush.msra.mxu0 %v1213
    %1378 = vmatpush.msra.mxu0 %v1212
    %1379 = vmatpush.msra.mxu0 %v1211
    %1380 = vmatpush.msra.mxu0 %v1210
    %1381 = vmatpush.msra.mxu0 %v1209
    %1382 = vmatpush.msra.mxu0 %v1208
    %1383 = vmatpush.msra.mxu0 %v1207
    %1384 = vmatpush.msra.mxu0 %v1206
    %1385 = vmatpush.msra.mxu0 %v1205
    %1386 = vmatpush.msra.mxu0 %v1204
    %1387 = vmatpush.msra.mxu0 %v1203
    %1388 = vmatpush.msra.mxu0 %v1202
    %1389 = vmatpush.msra.mxu0 %v1201
    %1390 = vmatmul.f32.gmra.mxu0 %v1346
    %v1391 = vpop.f32.mrf.mxu0
    %v1392 = vadd.f32 %v1372, %v1391
    %1393 = vdwg.mxu0
    %1394 = vmatpush.msra.mxu0 %v1232
    %1395 = vmatpush.msra.mxu0 %v1231
    %1396 = vmatpush.msra.mxu0 %v1230
    %1397 = vmatpush.msra.mxu0 %v1229
    %1398 = vmatpush.msra.mxu0 %v1228
    %1399 = vmatpush.msra.mxu0 %v1227
    %1400 = vmatpush.msra.mxu0 %v1226
    %1401 = vmatpush.msra.mxu0 %v1225
    %1402 = vmatpush.msra.mxu0 %v1224
    %1403 = vmatpush.msra.mxu0 %v1223
    %1404 = vmatpush.msra.mxu0 %v1222
    %1405 = vmatpush.msra.mxu0 %v1221
    %1406 = vmatpush.msra.mxu0 %v1220
    %1407 = vmatpush.msra.mxu0 %v1219
    %1408 = vmatpush.msra.mxu0 %v1218
    %1409 = vmatpush.msra.mxu0 %v1217
    %1410 = vmatmul.f32.gmra.mxu0 %v1347
    %v1411 = vpop.f32.mrf.mxu0
    %v1412 = vadd.f32 %v1392, %v1411
    %1413 = vdwg.mxu0
    %1414 = vmatpush.msra.mxu0 %v1248
    %1415 = vmatpush.msra.mxu0 %v1247
    %1416 = vmatpush.msra.mxu0 %v1246
    %1417 = vmatpush.msra.mxu0 %v1245
    %1418 = vmatpush.msra.mxu0 %v1244
    %1419 = vmatpush.msra.mxu0 %v1243
    %1420 = vmatpush.msra.mxu0 %v1242
    %1421 = vmatpush.msra.mxu0 %v1241
    %1422 = vmatpush.msra.mxu0 %v1240
    %1423 = vmatpush.msra.mxu0 %v1239
    %1424 = vmatpush.msra.mxu0 %v1238
    %1425 = vmatpush.msra.mxu0 %v1237
    %1426 = vmatpush.msra.mxu0 %v1236
    %1427 = vmatpush.msra.mxu0 %v1235
    %1428 = vmatpush.msra.mxu0 %v1234
    %1429 = vmatpush.msra.mxu0 %v1233
    %1430 = vmatmul.f32.gmra.mxu0 %v1348
    %v1431 = vpop.f32.mrf.mxu0
    %v1432 = vadd.f32 %v1412, %v1431
    %1433 = vdwg.mxu0
    %1434 = vmatpush.msra.mxu0 %v1264
    %1435 = vmatpush.msra.mxu0 %v1263
    %1436 = vmatpush.msra.mxu0 %v1262
    %1437 = vmatpush.msra.mxu0 %v1261
    %1438 = vmatpush.msra.mxu0 %v1260
    %1439 = vmatpush.msra.mxu0 %v1259
    %1440 = vmatpush.msra.mxu0 %v1258
    %1441 = vmatpush.msra.mxu0 %v1257
    %1442 = vmatpush.msra.mxu0 %v1256
    %1443 = vmatpush.msra.mxu0 %v1255
    %1444 = vmatpush.msra.mxu0 %v1254
    %1445 = vmatpush.msra.mxu0 %v1253
    %1446 = vmatpush.msra.mxu0 %v1252
    %1447 = vmatpush.msra.mxu0 %v1251
    %1448 = vmatpush.msra.mxu0 %v1250
    %1449 = vmatpush.msra.mxu0 %v1249
    %1450 = vmatmul.f32.gmra.mxu0 %v1349
    %v1451 = vpop.f32.mrf.mxu0
    %v1452 = vadd.f32 %v1432, %v1451
    %1453 = vdwg.mxu0
    %1454 = vmatpush.msra.mxu0 %v1280
    %1455 = vmatpush.msra.mxu0 %v1279
    %1456 = vmatpush.msra.mxu0 %v1278
    %1457 = vmatpush.msra.mxu0 %v1277
    %1458 = vmatpush.msra.mxu0 %v1276
    %1459 = vmatpush.msra.mxu0 %v1275
    %1460 = vmatpush.msra.mxu0 %v1274
    %1461 = vmatpush.msra.mxu0 %v1273
    %1462 = vmatpush.msra.mxu0 %v1272
    %1463 = vmatpush.msra.mxu0 %v1271
    %1464 = vmatpush.msra.mxu0 %v1270
    %1465 = vmatpush.msra.mxu0 %v1269
    %1466 = vmatpush.msra.mxu0 %v1268
    %1467 = vmatpush.msra.mxu0 %v1267
    %1468 = vmatpush.msra.mxu0 %v1266
    %1469 = vmatpush.msra.mxu0 %v1265
    %1470 = vmatmul.f32.gmra.mxu0 %v1350
    %v1471 = vpop.f32.mrf.mxu0
    %v1472 = vadd.f32 %v1452, %v1471
    %1473 = vdwg.mxu0
    %1474 = vmatpush.msra.mxu0 %v1296
    %1475 = vmatpush.msra.mxu0 %v1295
    %1476 = vmatpush.msra.mxu0 %v1294
    %1477 = vmatpush.msra.mxu0 %v1293
    %1478 = vmatpush.msra.mxu0 %v1292
    %1479 = vmatpush.msra.mxu0 %v1291
    %1480 = vmatpush.msra.mxu0 %v1290
    %1481 = vmatpush.msra.mxu0 %v1289
    %1482 = vmatpush.msra.mxu0 %v1288
    %1483 = vmatpush.msra.mxu0 %v1287
    %1484 = vmatpush.msra.mxu0 %v1286
    %1485 = vmatpush.msra.mxu0 %v1285
    %1486 = vmatpush.msra.mxu0 %v1284
    %1487 = vmatpush.msra.mxu0 %v1283
    %1488 = vmatpush.msra.mxu0 %v1282
    %1489 = vmatpush.msra.mxu0 %v1281
    %1490 = vmatmul.f32.gmra.mxu0 %v1351
    %v1491 = vpop.f32.mrf.mxu0
    %v1492 = vadd.f32 %v1472, %v1491
    %1493 = vdwg.mxu0
    %1494 = vmatpush.msra.mxu0 %v1312
    %1495 = vmatpush.msra.mxu0 %v1311
    %1496 = vmatpush.msra.mxu0 %v1310
    %1497 = vmatpush.msra.mxu0 %v1309
    %1498 = vmatpush.msra.mxu0 %v1308
    %1499 = vmatpush.msra.mxu0 %v1307
    %1500 = vmatpush.msra.mxu0 %v1306
    %1501 = vmatpush.msra.mxu0 %v1305
    %1502 = vmatpush.msra.mxu0 %v1304
    %1503 = vmatpush.msra.mxu0 %v1303
    %1504 = vmatpush.msra.mxu0 %v1302
    %1505 = vmatpush.msra.mxu0 %v1301
    %1506 = vmatpush.msra.mxu0 %v1300
    %1507 = vmatpush.msra.mxu0 %v1299
    %1508 = vmatpush.msra.mxu0 %v1298
    %1509 = vmatpush.msra.mxu0 %v1297
    %1510 = vmatmul.f32.gmra.mxu0 %v1352
    %v1511 = vpop.f32.mrf.mxu0
    %v1512 = vadd.f32 %v1492, %v1511
    %1513 = vdwg.mxu0
    %v1514 = vadd.f32 %v1353, %v1512
    %vm1515 = vcmask 261120
    %1516 = vst.msk [vmem:[#allocation2] sm:$0xff] %vm1515, %v1514
    %v1517 = vld [vmem:[#allocation3] sm:$0xff]
    %1518 = vmatpush.msra.mxu0 1.0
    %1519 = vmatpush.msra.mxu0 1.0
    %1520 = vmatpush.msra.mxu0 1.0
    %1521 = vmatpush.msra.mxu0 1.0
    %1522 = vmatpush.msra.mxu0 1.0
    %1523 = vmatpush.msra.mxu0 1.0
    %1524 = vmatpush.msra.mxu0 1.0
    %1525 = vmatpush.msra.mxu0 1.0
    %1526 = vmatpush.msra.mxu0 1.0
    %1527 = vmatpush.msra.mxu0 1.0
    %1528 = vmatpush.msra.mxu0 1.0
    %1529 = vmatpush.msra.mxu0 1.0
    %1530 = vmatpush.msra.mxu0 1.0
    %1531 = vmatpush.msra.mxu0 1.0
    %1532 = vmatpush.msra.mxu0 1.0
    %1533 = vmatpush.msra.mxu0 1.0
    %1534 = vmatmul.f32.gmra.mxu0 %v1345
    %v1535 = vpop.f32.mrf.mxu0
    %v1536 = vadd.f32 0.0, %v1535
    %1537 = vdwg.mxu0
    %1538 = vmatpush.msra.mxu0 1.0
    %1539 = vmatpush.msra.mxu0 1.0
    %1540 = vmatpush.msra.mxu0 1.0
    %1541 = vmatpush.msra.mxu0 1.0
    %1542 = vmatpush.msra.mxu0 1.0
    %1543 = vmatpush.msra.mxu0 1.0
    %1544 = vmatpush.msra.mxu0 1.0
    %1545 = vmatpush.msra.mxu0 1.0
    %1546 = vmatpush.msra.mxu0 1.0
    %1547 = vmatpush.msra.mxu0 1.0
    %1548 = vmatpush.msra.mxu0 1.0
    %1549 = vmatpush.msra.mxu0 1.0
    %1550 = vmatpush.msra.mxu0 1.0
    %1551 = vmatpush.msra.mxu0 1.0
    %1552 = vmatpush.msra.mxu0 1.0
    %1553 = vmatpush.msra.mxu0 1.0
    %1554 = vmatmul.f32.gmra.mxu0 %v1346
    %v1555 = vpop.f32.mrf.mxu0
    %v1556 = vadd.f32 %v1536, %v1555
    %1557 = vdwg.mxu0
    %1558 = vmatpush.msra.mxu0 1.0
    %1559 = vmatpush.msra.mxu0 1.0
    %1560 = vmatpush.msra.mxu0 1.0
    %1561 = vmatpush.msra.mxu0 1.0
    %1562 = vmatpush.msra.mxu0 1.0
    %1563 = vmatpush.msra.mxu0 1.0
    %1564 = vmatpush.msra.mxu0 1.0
    %1565 = vmatpush.msra.mxu0 1.0
    %1566 = vmatpush.msra.mxu0 1.0
    %1567 = vmatpush.msra.mxu0 1.0
    %1568 = vmatpush.msra.mxu0 1.0
    %1569 = vmatpush.msra.mxu0 1.0
    %1570 = vmatpush.msra.mxu0 1.0
    %1571 = vmatpush.msra.mxu0 1.0
    %1572 = vmatpush.msra.mxu0 1.0
    %1573 = vmatpush.msra.mxu0 1.0
    %1574 = vmatmul.f32.gmra.mxu0 %v1347
    %v1575 = vpop.f32.mrf.mxu0
    %v1576 = vadd.f32 %v1556, %v1575
    %1577 = vdwg.mxu0
    %1578 = vmatpush.msra.mxu0 1.0
    %1579 = vmatpush.msra.mxu0 1.0
    %1580 = vmatpush.msra.mxu0 1.0
    %1581 = vmatpush.msra.mxu0 1.0
    %1582 = vmatpush.msra.mxu0 1.0
    %1583 = vmatpush.msra.mxu0 1.0
    %1584 = vmatpush.msra.mxu0 1.0
    %1585 = vmatpush.msra.mxu0 1.0
    %1586 = vmatpush.msra.mxu0 1.0
    %1587 = vmatpush.msra.mxu0 1.0
    %1588 = vmatpush.msra.mxu0 1.0
    %1589 = vmatpush.msra.mxu0 1.0
    %1590 = vmatpush.msra.mxu0 1.0
    %1591 = vmatpush.msra.mxu0 1.0
    %1592 = vmatpush.msra.mxu0 1.0
    %1593 = vmatpush.msra.mxu0 1.0
    %1594 = vmatmul.f32.gmra.mxu0 %v1348
    %v1595 = vpop.f32.mrf.mxu0
    %v1596 = vadd.f32 %v1576, %v1595
    %1597 = vdwg.mxu0
    %1598 = vmatpush.msra.mxu0 1.0
    %1599 = vmatpush.msra.mxu0 1.0
    %1600 = vmatpush.msra.mxu0 1.0
    %1601 = vmatpush.msra.mxu0 1.0
    %1602 = vmatpush.msra.mxu0 1.0
    %1603 = vmatpush.msra.mxu0 1.0
    %1604 = vmatpush.msra.mxu0 1.0
    %1605 = vmatpush.msra.mxu0 1.0
    %1606 = vmatpush.msra.mxu0 1.0
    %1607 = vmatpush.msra.mxu0 1.0
    %1608 = vmatpush.msra.mxu0 1.0
    %1609 = vmatpush.msra.mxu0 1.0
    %1610 = vmatpush.msra.mxu0 1.0
    %1611 = vmatpush.msra.mxu0 1.0
    %1612 = vmatpush.msra.mxu0 1.0
    %1613 = vmatpush.msra.mxu0 1.0
    %1614 = vmatmul.f32.gmra.mxu0 %v1349
    %v1615 = vpop.f32.mrf.mxu0
    %v1616 = vadd.f32 %v1596, %v1615
    %1617 = vdwg.mxu0
    %1618 = vmatpush.msra.mxu0 1.0
    %1619 = vmatpush.msra.mxu0 1.0
    %1620 = vmatpush.msra.mxu0 1.0
    %1621 = vmatpush.msra.mxu0 1.0
    %1622 = vmatpush.msra.mxu0 1.0
    %1623 = vmatpush.msra.mxu0 1.0
    %1624 = vmatpush.msra.mxu0 1.0
    %1625 = vmatpush.msra.mxu0 1.0
    %1626 = vmatpush.msra.mxu0 1.0
    %1627 = vmatpush.msra.mxu0 1.0
    %1628 = vmatpush.msra.mxu0 1.0
    %1629 = vmatpush.msra.mxu0 1.0
    %1630 = vmatpush.msra.mxu0 1.0
    %1631 = vmatpush.msra.mxu0 1.0
    %1632 = vmatpush.msra.mxu0 1.0
    %1633 = vmatpush.msra.mxu0 1.0
    %1634 = vmatmul.f32.gmra.mxu0 %v1350
    %v1635 = vpop.f32.mrf.mxu0
    %v1636 = vadd.f32 %v1616, %v1635
    %1637 = vdwg.mxu0
    %1638 = vmatpush.msra.mxu0 1.0
    %1639 = vmatpush.msra.mxu0 1.0
    %1640 = vmatpush.msra.mxu0 1.0
    %1641 = vmatpush.msra.mxu0 1.0
    %1642 = vmatpush.msra.mxu0 1.0
    %1643 = vmatpush.msra.mxu0 1.0
    %1644 = vmatpush.msra.mxu0 1.0
    %1645 = vmatpush.msra.mxu0 1.0
    %1646 = vmatpush.msra.mxu0 1.0
    %1647 = vmatpush.msra.mxu0 1.0
    %1648 = vmatpush.msra.mxu0 1.0
    %1649 = vmatpush.msra.mxu0 1.0
    %1650 = vmatpush.msra.mxu0 1.0
    %1651 = vmatpush.msra.mxu0 1.0
    %1652 = vmatpush.msra.mxu0 1.0
    %1653 = vmatpush.msra.mxu0 1.0
    %1654 = vmatmul.f32.gmra.mxu0 %v1351
    %v1655 = vpop.f32.mrf.mxu0
    %v1656 = vadd.f32 %v1636, %v1655
    %1657 = vdwg.mxu0
    %1658 = vmatpush.msra.mxu0 1.0
    %1659 = vmatpush.msra.mxu0 1.0
    %1660 = vmatpush.msra.mxu0 1.0
    %1661 = vmatpush.msra.mxu0 1.0
    %1662 = vmatpush.msra.mxu0 1.0
    %1663 = vmatpush.msra.mxu0 1.0
    %1664 = vmatpush.msra.mxu0 1.0
    %1665 = vmatpush.msra.mxu0 1.0
    %1666 = vmatpush.msra.mxu0 1.0
    %1667 = vmatpush.msra.mxu0 1.0
    %1668 = vmatpush.msra.mxu0 1.0
    %1669 = vmatpush.msra.mxu0 1.0
    %1670 = vmatpush.msra.mxu0 1.0
    %1671 = vmatpush.msra.mxu0 1.0
    %1672 = vmatpush.msra.mxu0 1.0
    %1673 = vmatpush.msra.mxu0 1.0
    %1674 = vmatmul.f32.gmra.mxu0 %v1352
    %v1675 = vpop.f32.mrf.mxu0
    %v1676 = vadd.f32 %v1656, %v1675
    %1677 = vdwg.mxu0
    %v1678 = vadd.f32 %v1517, %v1676
    %vm1679 = vcmask 7168
    %1680 = vst.msk [vmem:[#allocation3] sm:$0xff] %vm1679, %v1678
    %v1681 = vld [vmem:[#allocation2] sm:$0xff]
    %v1682 = vld [vmem:[#allocation3] sm:$0xff]
    %v1683 = vmax.f32 %v1682, 1.0
    %1685 = vset.pattern.permute.xlu0 0
    %1686 = vperm.xlu0 %1685, %v1683
    %v1687 = vpop.permute.xlu0 %1686
    %v1689 = vrcp.pop %v1687
    %v1690 = vmul.f32 %v1687, %v1689
    %v1691 = vsub.f32 1.0, %v1690
    %v1692 = vmul.f32 %v1689, %v1691
    %v1693 = vadd.f32 %v1689, %v1692
    %vm1694 = vweird.f32 %v1687
    %vm1695 = vweird.f32 %v1689
    %vm1696 = vmor %vm1694, %vm1695
    %v1697 = vsel %vm1696, %v1689, %v1693
    %v1698 = vand.u32 2147483647, %v1687
    %vm1699 = vcmp.eq.f32.partialorder %v1698, 8.507059e+37
    %v1700 = vand.u32 %v1687, 2147483648
    %v1701 = vor.u32 1.1754944e-38, %v1700
    %v1702 = vsel %vm1699, %v1701, %v1697
    %v1703 = vmul.f32 %v1681, %v1702
    %v1704 = vld [vmem:[%s2] sm:$0xff]
    %v1705 = vld [vmem:[%s2 + $0x8] sm:$0xff]
    %v1706 = vld [vmem:[%s2 + $0x10] sm:$0xff]
    %v1707 = vld [vmem:[%s2 + $0x18] sm:$0xff]
    %v1708 = vld [vmem:[%s3] sm:$0x1]
    %v1710 = vperm.slane %v1708, 0
    %v1713 = vsel %vm1515, %v1703, 0
    %1715 = vmatpush.msra.mxu0 0.0
    %1716 = vmatpush.msra.mxu0 0.0
    %1717 = vmatpush.msra.mxu0 0.0
    %1718 = vmatpush.msra.mxu0 0.0
    %1719 = vmatpush.msra.mxu0 0.0
    %1720 = vmatpush.msra.mxu0 0.0
    %1721 = vmatpush.msra.mxu0 0.0
    %1722 = vmatpush.msra.mxu0 0.0
    %1723 = vmatpush.msra.mxu0 0.0
    %1724 = vmatpush.msra.mxu0 0.0
    %1725 = vmatpush.msra.mxu0 0.0
    %1726 = vmatpush.msra.mxu0 0.0
    %1727 = vmatpush.msra.mxu0 %v1707
    %1728 = vmatpush.msra.mxu0 %v1706
    %1729 = vmatpush.msra.mxu0 %v1705
    %1730 = vmatpush.msra.mxu0 %v1704
    %1731 = vmatmul.f32.gmra.mxu0 %v1713
    %v1732 = vpop.f32.mrf.mxu0
    %v1733 = vadd.f32 %v1710, %v1732
    %1734 = vdwg.mxu0
    %vm1735 = vcmp.gt.f32.partialorder %v1733, 0.0
    %v1736 = vmin.f32 %v1733, 0.0
    %v1737 = vmul.f32 %v1736, 1.442695
    %v1738 = vpow.pop %v1737
    %v1739 = vsub.f32 %v1738, 1.0
    %v1740 = vsel %vm1735, %v1733, %v1739
    %v1741 = vld [vmem:[%s4] sm:$0xff]
    %v1742 = vld [vmem:[%s4 + $0x8] sm:$0xff]
    %v1743 = vld [vmem:[%s5] sm:$0x1]
    %v1745 = vperm.slane %v1743, 0
    %vm1747 = vcmask 130048
    %v1749 = vsel %vm1747, %v1740, 0
    %1751 = vmatpush.msra.mxu0 0.0
    %1752 = vmatpush.msra.mxu0 0.0
    %1753 = vmatpush.msra.mxu0 0.0
    %1754 = vmatpush.msra.mxu0 0.0
    %1755 = vmatpush.msra.mxu0 0.0
    %1756 = vmatpush.msra.mxu0 0.0
    %1757 = vmatpush.msra.mxu0 0.0
    %1758 = vmatpush.msra.mxu0 0.0
    %1759 = vmatpush.msra.mxu0 0.0
    %1760 = vmatpush.msra.mxu0 0.0
    %1761 = vmatpush.msra.mxu0 0.0
    %1762 = vmatpush.msra.mxu0 0.0
    %1763 = vmatpush.msra.mxu0 0.0
    %1764 = vmatpush.msra.mxu0 0.0
    %1765 = vmatpush.msra.mxu0 %v1742
    %1766 = vmatpush.msra.mxu0 %v1741
    %1767 = vmatmul.f32.gmra.mxu0 %v1749
    %v1768 = vpop.f32.mrf.mxu0
    %v1769 = vadd.f32 %v1745, %v1768
    %1770 = vdwg.mxu0
    %vm1771 = vcmask 31744
    %1772 = vst.msk [vmem:[%s6] sm:$0xff] %vm1771, %v1769
  $region37: #{tpu_custom_call.1} parent=0 // pred_fallthru
    _
  // Predicated region
  $region38: #{tpu_custom_call.1} parent=0 // pred_check
    _
  $region39: #{tpu_custom_call.1} parent=0 // pred_check_branch
    %1774 = sbr.rel (0) target = $region41
  $region40: #{tpu_custom_call.1} parent=0 // pred_region
    _
  $region41: #{tpu_custom_call.1} parent=0 // pred_fallthru
    _
  // Predicated region
  $region42: #{tpu_custom_call.1} parent=0 // pred_check
    _
  $region43: #{tpu_custom_call.1} parent=0 // pred_check_branch
    %1776 = sbr.rel (0) target = $region45
  $region44: #{tpu_custom_call.1} parent=0 // pred_region
    _
  $region45: #{tpu_custom_call.1} parent=0 // pred_fallthru
    _

</llo_original>
